<compile_context>
chip_gen: v5e
topology: v5e:2x2
jax: 0.10.0
libtpu: 0.0.40
codegen_flags: <defaults>
</compile_context>

<pallas_src>
import jax
import jax.numpy as jnp
import numpy as np
from jax import lax
from jax.experimental import pallas as pl
from jax.experimental.pallas import tpu as pltpu

EPS = 1e-5  # nn.InstanceNorm2d default eps (affine=False, biased variance)


# ----------------------------------------------------------------------------
# Pallas kernel: fused  (W @ patches)  ->  InstanceNorm(spatial)  ->  ReLU
# ----------------------------------------------------------------------------
def _conv_in_relu_kernel(p_ref, w_ref, o_ref):
    """One batch sample.

    p_ref: (1, CKK, P)  bf16 im2col patches (rows = (Cin, kh, kw), cols = spatial)
    w_ref: (Cout, CKK)  bf16 flattened OIHW conv weights
    o_ref: (1, Cout, P) f32  normalized + ReLU'd activations (NCHW-flat)
    """
    # MXU matmul, bf16 inputs, f32 accumulation. P on lanes -> dense stores.
    z = jnp.dot(w_ref[...], p_ref[0], preferred_element_type=jnp.float32)  # (Cout, P)

    # Single-pass InstanceNorm over spatial (lanes): var = E[z^2] - mean^2.
    inv_p = 1.0 / z.shape[1]
    s1 = jnp.sum(z, axis=1, keepdims=True)          # (Cout, 1)
    s2 = jnp.sum(z * z, axis=1, keepdims=True)      # (Cout, 1)
    mean = s1 * inv_p
    var = s2 * inv_p - mean * mean
    scale = lax.rsqrt(var + EPS)                    # EUP

    o_ref[0] = jnp.maximum((z - mean) * scale, 0.0)  # ReLU


def _conv_in_relu(patches, w2t):
    """patches: (B, CKK, P) bf16, w2t: (Cout, CKK) bf16 -> (B, Cout, P) f32."""
    B, CKK, P = patches.shape
    Cout = w2t.shape[0]
    return pl.pallas_call(
        _conv_in_relu_kernel,
        out_shape=jax.ShapeDtypeStruct((B, Cout, P), jnp.float32),
        grid=(B,),
        in_specs=[
            pl.BlockSpec((1, CKK, P), lambda b: (b, 0, 0)),
            pl.BlockSpec((Cout, CKK), lambda b: (0, 0)),   # weights resident
        ],
        out_specs=pl.BlockSpec((1, Cout, P), lambda b: (b, 0, 0)),
        compiler_params=pltpu.CompilerParams(dimension_semantics=("parallel",)),
    )(patches, w2t)


# ----------------------------------------------------------------------------
# Plain-JAX glue: transposed im2col, conv5, params
# ----------------------------------------------------------------------------
def _im2col_T(x, k, stride, padding):
    """x: (B, C, H, W) -> (B, C*k*k, Ho*Wo).

    Row order (c, kh, kw) matches PyTorch OIHW weight flattening; columns are
    spatial positions in raster (ho, wo) order, so the kernel output (Cout, P)
    is already NCHW-flat.
    """
    B, C, H, W = x.shape
    if padding > 0:
        x = jnp.pad(x, ((0, 0), (0, 0), (padding, padding), (padding, padding)))
    Hp, Wp = H + 2 * padding, W + 2 * padding
    Ho = (Hp - k) // stride + 1
    Wo = (Wp - k) // stride + 1
    cols = []
    for kh in range(k):
        for kw in range(k):
            sl = x[:, :, kh:kh + stride * (Ho - 1) + 1:stride,
                         kw:kw + stride * (Wo - 1) + 1:stride]      # (B, C, Ho, Wo)
            cols.append(sl.reshape(B, C, Ho * Wo))
    p = jnp.stack(cols, axis=2)                                     # (B, C, k*k, P)
    return p.reshape(B, C * k * k, Ho * Wo), Ho, Wo


def _conv5(x, w5, b5):
    """Conv2d(8cd, 1, k=4, s=1, p=0, bias=True) on (B, C, 4, 4) -> squeezed logits.

    One dot of length C*16 per sample: done in plain XLA (a Pallas call here is
    pure overhead).
    """
    z = jnp.einsum("bchw,ochw->bo", x, w5, precision=lax.Precision.HIGHEST)
    return jnp.squeeze(z + b5)


def init_params(key, conv_dim=8):
    """Deterministic synthetic params, PyTorch OIHW weight layout."""
    chans = [3, conv_dim, conv_dim * 2, conv_dim * 4, conv_dim * 8]
    params = {}
    keys = jax.random.split(key, 6)
    for i in range(4):
        cin, cout = chans[i], chans[i + 1]
        params[f"w{i + 1}"] = 0.05 * jax.random.normal(
            keys[i], (cout, cin, 4, 4), dtype=jnp.float32)
    params["w5"] = 0.05 * jax.random.normal(
        keys[4], (1, chans[4], 4, 4), dtype=jnp.float32)
    params["b5"] = 0.05 * jax.random.normal(keys[5], (1,), dtype=jnp.float32)
    return params


@jax.jit
def discriminator_forward(x, params):
    """x: (B, 3, H, W) float32 NCHW -> squeezed logits (B,)."""
    B = x.shape[0]
    h = x
    # conv1..conv4: Conv(k=4,s=2,p=1,bias=False) + InstanceNorm + ReLU (fused kernel)
    for i in range(1, 5):
        w = params[f"w{i}"]                                    # (Cout, Cin, 4, 4)
        cout = w.shape[0]
        patches, Ho, Wo = _im2col_T(h.astype(jnp.bfloat16), 4, 2, 1)  # (B, CKK, P) bf16
        w2t = w.reshape(cout, -1).astype(jnp.bfloat16)                # (Cout, CKK) bf16
        out = _conv_in_relu(patches, w2t)                             # (B, Cout, P) f32
        h = out.reshape(B, cout, Ho, Wo)                              # free reshape (NCHW)
    # conv5: Conv(k=4,s=1,p=0,bias=True), no norm/activation — plain XLA dot.
    return _conv5(h, params["w5"], params["b5"])


# ----------------------------------------------------------------------------
# Reference (same bf16 matmul-input precision as the kernel path; f32 norm)
# ----------------------------------------------------------------------------
def _ref_forward(x, params):
    def conv_bf16(x, w, stride, padding):
        return lax.conv_general_dilated(
            x.astype(jnp.bfloat16), w.astype(jnp.bfloat16),
            window_strides=(stride, stride),
            padding=[(padding, padding), (padding, padding)],
            dimension_numbers=("NCHW", "OIHW", "NCHW"),
            preferred_element_type=jnp.float32)

    def inorm_relu(z):
        mean = jnp.mean(z, axis=(2, 3), keepdims=True)
        var = jnp.mean((z - mean) ** 2, axis=(2, 3), keepdims=True)
        return jnp.maximum((z - mean) * lax.rsqrt(var + EPS), 0.0)

    h = x
    for i in range(1, 5):
        h = inorm_relu(conv_bf16(h, params[f"w{i}"], 2, 1))
    return _conv5(h, params["w5"], params["b5"])


if __name__ == "__main__":
    key = jax.random.PRNGKey(0)
    k_x, k_p = jax.random.split(key)

    B, conv_dim, H = 2, 8, 64          # 64x64 input -> 1x1 after conv5
    x = jax.random.normal(k_x, (B, 3, H, H), dtype=jnp.float32)
    params = init_params(k_p, conv_dim=conv_dim)

    out = jax.block_until_ready(discriminator_forward(x, params))
    ref = jax.block_until_ready(_ref_forward(x, params))

    assert out.shape == ref.shape == (B,), (out.shape, ref.shape)
    np.testing.assert_allclose(np.asarray(out), np.asarray(ref), rtol=1e-2, atol=1e-2)

    print("KERNEL_OK")
</pallas_src>

<mosaic_0001>
module attributes {stable_mosaic.version = 11 : i64} {
  func.func @_conv_in_relu_kernel(%arg0: i32, %arg1: memref<1x48x1024xbf16, #tpu.memory_space<vmem>>, %arg2: memref<8x48xbf16, #tpu.memory_space<vmem>>, %arg3: memref<1x8x1024xf32, #tpu.memory_space<vmem>>) attributes {dimension_semantics = [#tpu.dimension_semantics<parallel>], iteration_bounds = array<i64: 2>, scalar_prefetch = 0 : i64, scratch_operands = 0 : i64, tpu.core_type = #tpu.core_type<tc>, window_params = [{transform_indices = @transform_0, window_bounds = array<i64: 1, 48, 1024>}, {pipeline_mode = #tpu.pipeline_mode<synchronous>, transform_indices = @transform_1, window_bounds = array<i64: 8, 48>}, {transform_indices = @transform_2, window_bounds = array<i64: 1, 8, 1024>}]} {
    %c0 = arith.constant 0 : index
    %c0_0 = arith.constant 0 : index
    %0 = vector.load %arg2[%c0, %c0_0] : memref<8x48xbf16, #tpu.memory_space<vmem>>, vector<8x48xbf16>
    %c0_1 = arith.constant 0 : index
    %c0_2 = arith.constant 0 : index
    %c0_3 = arith.constant 0 : index
    %1 = vector.load %arg1[%c0_1, %c0_2, %c0_3] : memref<1x48x1024xbf16, #tpu.memory_space<vmem>>, vector<1x48x1024xbf16>
    %2 = vector.shape_cast %1 : vector<1x48x1024xbf16> to vector<48x1024xbf16>
    %cst = arith.constant dense<0.000000e+00> : vector<8x1024xf32>
    %3 = tpu.matmul %0, %2, %cst {dimension_numbers = #tpu.dot_dimension_numbers<[1], [0], [0], [1], [0, 0, 1, 1], [], []>} : vector<8x48xbf16>, vector<48x1024xbf16>, vector<8x1024xf32> -> vector<8x1024xf32>
    %cst_4 = arith.constant dense<0.000000e+00> : vector<8xf32>
    %4 = vector.multi_reduction <add>, %3, %cst_4 [1] : vector<8x1024xf32> to vector<8xf32>
    %5 = vector.shape_cast %4 : vector<8xf32> to vector<8x1xf32>
    %6 = arith.mulf %3, %3 : vector<8x1024xf32>
    %cst_5 = arith.constant dense<0.000000e+00> : vector<8xf32>
    %7 = vector.multi_reduction <add>, %6, %cst_5 [1] : vector<8x1024xf32> to vector<8xf32>
    %8 = vector.shape_cast %7 : vector<8xf32> to vector<8x1xf32>
    %cst_6 = arith.constant 9.765625E-4 : f32
    %9 = vector.broadcast %cst_6 : f32 to vector<8x1xf32>
    %10 = arith.mulf %5, %9 : vector<8x1xf32>
    %cst_7 = arith.constant 9.765625E-4 : f32
    %11 = vector.broadcast %cst_7 : f32 to vector<8x1xf32>
    %12 = arith.mulf %8, %11 : vector<8x1xf32>
    %13 = arith.mulf %10, %10 : vector<8x1xf32>
    %14 = arith.subf %12, %13 : vector<8x1xf32>
    %cst_8 = arith.constant 9.99999974E-6 : f32
    %15 = vector.broadcast %cst_8 : f32 to vector<8x1xf32>
    %16 = arith.addf %14, %15 : vector<8x1xf32>
    %17 = math.rsqrt %16 : vector<8x1xf32>
    %18 = vector.broadcast %10 : vector<8x1xf32> to vector<8x1024xf32>
    %19 = arith.subf %3, %18 : vector<8x1024xf32>
    %20 = vector.broadcast %17 : vector<8x1xf32> to vector<8x1024xf32>
    %21 = arith.mulf %19, %20 : vector<8x1024xf32>
    %cst_9 = arith.constant 0.000000e+00 : f32
    %22 = vector.broadcast %cst_9 : f32 to vector<8x1024xf32>
    %23 = arith.maximumf %21, %22 : vector<8x1024xf32>
    %c0_10 = arith.constant 0 : index
    %c0_11 = arith.constant 0 : index
    %c0_12 = arith.constant 0 : index
    %24 = vector.load %arg3[%c0_10, %c0_11, %c0_12] : memref<1x8x1024xf32, #tpu.memory_space<vmem>>, vector<1x8x1024xf32>
    %25 = vector.shape_cast %24 : vector<1x8x1024xf32> to vector<8x1024xf32>
    %26 = vector.shape_cast %23 : vector<8x1024xf32> to vector<1x8x1024xf32>
    tpu.vector_store %arg3[%c0_10, %c0_11, %c0_12], %26 {strides = array<i32>} : memref<1x8x1024xf32, #tpu.memory_space<vmem>>, vector<1x8x1024xf32>,
    return
  }
  func.func @transform_0(%arg0: i32) -> (i32, i32, i32) {
    %c0_i32 = arith.constant 0 : i32
    %c0_i32_0 = arith.constant 0 : i32
    %c0_i32_1 = arith.constant 0 : i32
    return %arg0, %c0_i32, %c0_i32_0 : i32, i32, i32
  }
  func.func @transform_1(%arg0: i32) -> (i32, i32) {
    %c0_i32 = arith.constant 0 : i32
    %c0_i32_0 = arith.constant 0 : i32
    %c0_i32_1 = arith.constant 0 : i32
    return %c0_i32, %c0_i32_0 : i32, i32
  }
  func.func @transform_2(%arg0: i32) -> (i32, i32, i32) {
    %c0_i32 = arith.constant 0 : i32
    %c0_i32_0 = arith.constant 0 : i32
    %c0_i32_1 = arith.constant 0 : i32
    return %arg0, %c0_i32, %c0_i32_0 : i32, i32, i32
  }
}

module attributes {stable_mosaic.version = 11 : i64} {
  func.func @_conv_in_relu_kernel(%arg0: i32, %arg1: memref<1x128x256xbf16, #tpu.memory_space<vmem>>, %arg2: memref<16x128xbf16, #tpu.memory_space<vmem>>, %arg3: memref<1x16x256xf32, #tpu.memory_space<vmem>>) attributes {dimension_semantics = [#tpu.dimension_semantics<parallel>], iteration_bounds = array<i64: 2>, scalar_prefetch = 0 : i64, scratch_operands = 0 : i64, tpu.core_type = #tpu.core_type<tc>, window_params = [{transform_indices = @transform_0, window_bounds = array<i64: 1, 128, 256>}, {pipeline_mode = #tpu.pipeline_mode<synchronous>, transform_indices = @transform_1, window_bounds = array<i64: 16, 128>}, {transform_indices = @transform_2, window_bounds = array<i64: 1, 16, 256>}]} {
    %c0 = arith.constant 0 : index
    %c0_0 = arith.constant 0 : index
    %0 = vector.load %arg2[%c0, %c0_0] : memref<16x128xbf16, #tpu.memory_space<vmem>>, vector<16x128xbf16>
    %c0_1 = arith.constant 0 : index
    %c0_2 = arith.constant 0 : index
    %c0_3 = arith.constant 0 : index
    %1 = vector.load %arg1[%c0_1, %c0_2, %c0_3] : memref<1x128x256xbf16, #tpu.memory_space<vmem>>, vector<1x128x256xbf16>
    %2 = vector.shape_cast %1 : vector<1x128x256xbf16> to vector<128x256xbf16>
    %cst = arith.constant dense<0.000000e+00> : vector<16x256xf32>
    %3 = tpu.matmul %0, %2, %cst {dimension_numbers = #tpu.dot_dimension_numbers<[1], [0], [0], [1], [0, 0, 1, 1], [], []>} : vector<16x128xbf16>, vector<128x256xbf16>, vector<16x256xf32> -> vector<16x256xf32>
    %cst_4 = arith.constant dense<0.000000e+00> : vector<16xf32>
    %4 = vector.multi_reduction <add>, %3, %cst_4 [1] : vector<16x256xf32> to vector<16xf32>
    %5 = vector.shape_cast %4 : vector<16xf32> to vector<16x1xf32>
    %6 = arith.mulf %3, %3 : vector<16x256xf32>
    %cst_5 = arith.constant dense<0.000000e+00> : vector<16xf32>
    %7 = vector.multi_reduction <add>, %6, %cst_5 [1] : vector<16x256xf32> to vector<16xf32>
    %8 = vector.shape_cast %7 : vector<16xf32> to vector<16x1xf32>
    %cst_6 = arith.constant 3.906250e-03 : f32
    %9 = vector.broadcast %cst_6 : f32 to vector<16x1xf32>
    %10 = arith.mulf %5, %9 : vector<16x1xf32>
    %cst_7 = arith.constant 3.906250e-03 : f32
    %11 = vector.broadcast %cst_7 : f32 to vector<16x1xf32>
    %12 = arith.mulf %8, %11 : vector<16x1xf32>
    %13 = arith.mulf %10, %10 : vector<16x1xf32>
    %14 = arith.subf %12, %13 : vector<16x1xf32>
    %cst_8 = arith.constant 9.99999974E-6 : f32
    %15 = vector.broadcast %cst_8 : f32 to vector<16x1xf32>
    %16 = arith.addf %14, %15 : vector<16x1xf32>
    %17 = math.rsqrt %16 : vector<16x1xf32>
    %18 = vector.broadcast %10 : vector<16x1xf32> to vector<16x256xf32>
    %19 = arith.subf %3, %18 : vector<16x256xf32>
    %20 = vector.broadcast %17 : vector<16x1xf32> to vector<16x256xf32>
    %21 = arith.mulf %19, %20 : vector<16x256xf32>
    %cst_9 = arith.constant 0.000000e+00 : f32
    %22 = vector.broadcast %cst_9 : f32 to vector<16x256xf32>
    %23 = arith.maximumf %21, %22 : vector<16x256xf32>
    %c0_10 = arith.constant 0 : index
    %c0_11 = arith.constant 0 : index
    %c0_12 = arith.constant 0 : index
    %24 = vector.load %arg3[%c0_10, %c0_11, %c0_12] : memref<1x16x256xf32, #tpu.memory_space<vmem>>, vector<1x16x256xf32>
    %25 = vector.shape_cast %24 : vector<1x16x256xf32> to vector<16x256xf32>
    %26 = vector.shape_cast %23 : vector<16x256xf32> to vector<1x16x256xf32>
    tpu.vector_store %arg3[%c0_10, %c0_11, %c0_12], %26 {strides = array<i32>} : memref<1x16x256xf32, #tpu.memory_space<vmem>>, vector<1x16x256xf32>,
    return
  }
  func.func @transform_0(%arg0: i32) -> (i32, i32, i32) {
    %c0_i32 = arith.constant 0 : i32
    %c0_i32_0 = arith.constant 0 : i32
    %c0_i32_1 = arith.constant 0 : i32
    return %arg0, %c0_i32, %c0_i32_0 : i32, i32, i32
  }
  func.func @transform_1(%arg0: i32) -> (i32, i32) {
    %c0_i32 = arith.constant 0 : i32
    %c0_i32_0 = arith.constant 0 : i32
    %c0_i32_1 = arith.constant 0 : i32
    return %c0_i32, %c0_i32_0 : i32, i32
  }
  func.func @transform_2(%arg0: i32) -> (i32, i32, i32) {
    %c0_i32 = arith.constant 0 : i32
    %c0_i32_0 = arith.constant 0 : i32
    %c0_i32_1 = arith.constant 0 : i32
    return %arg0, %c0_i32, %c0_i32_0 : i32, i32, i32
  }
}

module attributes {stable_mosaic.version = 11 : i64} {
  func.func @_conv_in_relu_kernel(%arg0: i32, %arg1: memref<1x256x64xbf16, #tpu.memory_space<vmem>>, %arg2: memref<32x256xbf16, #tpu.memory_space<vmem>>, %arg3: memref<1x32x64xf32, #tpu.memory_space<vmem>>) attributes {dimension_semantics = [#tpu.dimension_semantics<parallel>], iteration_bounds = array<i64: 2>, scalar_prefetch = 0 : i64, scratch_operands = 0 : i64, tpu.core_type = #tpu.core_type<tc>, window_params = [{transform_indices = @transform_0, window_bounds = array<i64: 1, 256, 64>}, {pipeline_mode = #tpu.pipeline_mode<synchronous>, transform_indices = @transform_1, window_bounds = array<i64: 32, 256>}, {transform_indices = @transform_2, window_bounds = array<i64: 1, 32, 64>}]} {
    %c0 = arith.constant 0 : index
    %c0_0 = arith.constant 0 : index
    %0 = vector.load %arg2[%c0, %c0_0] : memref<32x256xbf16, #tpu.memory_space<vmem>>, vector<32x256xbf16>
    %c0_1 = arith.constant 0 : index
    %c0_2 = arith.constant 0 : index
    %c0_3 = arith.constant 0 : index
    %1 = vector.load %arg1[%c0_1, %c0_2, %c0_3] : memref<1x256x64xbf16, #tpu.memory_space<vmem>>, vector<1x256x64xbf16>
    %2 = vector.shape_cast %1 : vector<1x256x64xbf16> to vector<256x64xbf16>
    %cst = arith.constant dense<0.000000e+00> : vector<32x64xf32>
    %3 = tpu.matmul %0, %2, %cst {dimension_numbers = #tpu.dot_dimension_numbers<[1], [0], [0], [1], [0, 0, 1, 1], [], []>} : vector<32x256xbf16>, vector<256x64xbf16>, vector<32x64xf32> -> vector<32x64xf32>
    %cst_4 = arith.constant dense<0.000000e+00> : vector<32xf32>
    %4 = vector.multi_reduction <add>, %3, %cst_4 [1] : vector<32x64xf32> to vector<32xf32>
    %5 = vector.shape_cast %4 : vector<32xf32> to vector<32x1xf32>
    %6 = arith.mulf %3, %3 : vector<32x64xf32>
    %cst_5 = arith.constant dense<0.000000e+00> : vector<32xf32>
    %7 = vector.multi_reduction <add>, %6, %cst_5 [1] : vector<32x64xf32> to vector<32xf32>
    %8 = vector.shape_cast %7 : vector<32xf32> to vector<32x1xf32>
    %cst_6 = arith.constant 1.562500e-02 : f32
    %9 = vector.broadcast %cst_6 : f32 to vector<32x1xf32>
    %10 = arith.mulf %5, %9 : vector<32x1xf32>
    %cst_7 = arith.constant 1.562500e-02 : f32
    %11 = vector.broadcast %cst_7 : f32 to vector<32x1xf32>
    %12 = arith.mulf %8, %11 : vector<32x1xf32>
    %13 = arith.mulf %10, %10 : vector<32x1xf32>
    %14 = arith.subf %12, %13 : vector<32x1xf32>
    %cst_8 = arith.constant 9.99999974E-6 : f32
    %15 = vector.broadcast %cst_8 : f32 to vector<32x1xf32>
    %16 = arith.addf %14, %15 : vector<32x1xf32>
    %17 = math.rsqrt %16 : vector<32x1xf32>
    %18 = vector.broadcast %10 : vector<32x1xf32> to vector<32x64xf32>
    %19 = arith.subf %3, %18 : vector<32x64xf32>
    %20 = vector.broadcast %17 : vector<32x1xf32> to vector<32x64xf32>
    %21 = arith.mulf %19, %20 : vector<32x64xf32>
    %cst_9 = arith.constant 0.000000e+00 : f32
    %22 = vector.broadcast %cst_9 : f32 to vector<32x64xf32>
    %23 = arith.maximumf %21, %22 : vector<32x64xf32>
    %c0_10 = arith.constant 0 : index
    %c0_11 = arith.constant 0 : index
    %c0_12 = arith.constant 0 : index
    %24 = vector.load %arg3[%c0_10, %c0_11, %c0_12] : memref<1x32x64xf32, #tpu.memory_space<vmem>>, vector<1x32x64xf32>
    %25 = vector.shape_cast %24 : vector<1x32x64xf32> to vector<32x64xf32>
    %26 = vector.shape_cast %23 : vector<32x64xf32> to vector<1x32x64xf32>
    tpu.vector_store %arg3[%c0_10, %c0_11, %c0_12], %26 {strides = array<i32>} : memref<1x32x64xf32, #tpu.memory_space<vmem>>, vector<1x32x64xf32>,
    return
  }
  func.func @transform_0(%arg0: i32) -> (i32, i32, i32) {
    %c0_i32 = arith.constant 0 : i32
    %c0_i32_0 = arith.constant 0 : i32
    %c0_i32_1 = arith.constant 0 : i32
    return %arg0, %c0_i32, %c0_i32_0 : i32, i32, i32
  }
  func.func @transform_1(%arg0: i32) -> (i32, i32) {
    %c0_i32 = arith.constant 0 : i32
    %c0_i32_0 = arith.constant 0 : i32
    %c0_i32_1 = arith.constant 0 : i32
    return %c0_i32, %c0_i32_0 : i32, i32
  }
  func.func @transform_2(%arg0: i32) -> (i32, i32, i32) {
    %c0_i32 = arith.constant 0 : i32
    %c0_i32_0 = arith.constant 0 : i32
    %c0_i32_1 = arith.constant 0 : i32
    return %arg0, %c0_i32, %c0_i32_0 : i32, i32, i32
  }
}

module attributes {stable_mosaic.version = 11 : i64} {
  func.func @_conv_in_relu_kernel(%arg0: i32, %arg1: memref<1x512x16xbf16, #tpu.memory_space<vmem>>, %arg2: memref<64x512xbf16, #tpu.memory_space<vmem>>, %arg3: memref<1x64x16xf32, #tpu.memory_space<vmem>>) attributes {dimension_semantics = [#tpu.dimension_semantics<parallel>], iteration_bounds = array<i64: 2>, scalar_prefetch = 0 : i64, scratch_operands = 0 : i64, tpu.core_type = #tpu.core_type<tc>, window_params = [{transform_indices = @transform_0, window_bounds = array<i64: 1, 512, 16>}, {pipeline_mode = #tpu.pipeline_mode<synchronous>, transform_indices = @transform_1, window_bounds = array<i64: 64, 512>}, {transform_indices = @transform_2, window_bounds = array<i64: 1, 64, 16>}]} {
    %c0 = arith.constant 0 : index
    %c0_0 = arith.constant 0 : index
    %0 = vector.load %arg2[%c0, %c0_0] : memref<64x512xbf16, #tpu.memory_space<vmem>>, vector<64x512xbf16>
    %c0_1 = arith.constant 0 : index
    %c0_2 = arith.constant 0 : index
    %c0_3 = arith.constant 0 : index
    %1 = vector.load %arg1[%c0_1, %c0_2, %c0_3] : memref<1x512x16xbf16, #tpu.memory_space<vmem>>, vector<1x512x16xbf16>
    %2 = vector.shape_cast %1 : vector<1x512x16xbf16> to vector<512x16xbf16>
    %cst = arith.constant dense<0.000000e+00> : vector<64x16xf32>
    %3 = tpu.matmul %0, %2, %cst {dimension_numbers = #tpu.dot_dimension_numbers<[1], [0], [0], [1], [0, 0, 1, 1], [], []>} : vector<64x512xbf16>, vector<512x16xbf16>, vector<64x16xf32> -> vector<64x16xf32>
    %cst_4 = arith.constant dense<0.000000e+00> : vector<64xf32>
    %4 = vector.multi_reduction <add>, %3, %cst_4 [1] : vector<64x16xf32> to vector<64xf32>
    %5 = vector.shape_cast %4 : vector<64xf32> to vector<64x1xf32>
    %6 = arith.mulf %3, %3 : vector<64x16xf32>
    %cst_5 = arith.constant dense<0.000000e+00> : vector<64xf32>
    %7 = vector.multi_reduction <add>, %6, %cst_5 [1] : vector<64x16xf32> to vector<64xf32>
    %8 = vector.shape_cast %7 : vector<64xf32> to vector<64x1xf32>
    %cst_6 = arith.constant 6.250000e-02 : f32
    %9 = vector.broadcast %cst_6 : f32 to vector<64x1xf32>
    %10 = arith.mulf %5, %9 : vector<64x1xf32>
    %cst_7 = arith.constant 6.250000e-02 : f32
    %11 = vector.broadcast %cst_7 : f32 to vector<64x1xf32>
    %12 = arith.mulf %8, %11 : vector<64x1xf32>
    %13 = arith.mulf %10, %10 : vector<64x1xf32>
    %14 = arith.subf %12, %13 : vector<64x1xf32>
    %cst_8 = arith.constant 9.99999974E-6 : f32
    %15 = vector.broadcast %cst_8 : f32 to vector<64x1xf32>
    %16 = arith.addf %14, %15 : vector<64x1xf32>
    %17 = math.rsqrt %16 : vector<64x1xf32>
    %18 = vector.broadcast %10 : vector<64x1xf32> to vector<64x16xf32>
    %19 = arith.subf %3, %18 : vector<64x16xf32>
    %20 = vector.broadcast %17 : vector<64x1xf32> to vector<64x16xf32>
    %21 = arith.mulf %19, %20 : vector<64x16xf32>
    %cst_9 = arith.constant 0.000000e+00 : f32
    %22 = vector.broadcast %cst_9 : f32 to vector<64x16xf32>
    %23 = arith.maximumf %21, %22 : vector<64x16xf32>
    %c0_10 = arith.constant 0 : index
    %c0_11 = arith.constant 0 : index
    %c0_12 = arith.constant 0 : index
    %24 = vector.load %arg3[%c0_10, %c0_11, %c0_12] : memref<1x64x16xf32, #tpu.memory_space<vmem>>, vector<1x64x16xf32>
    %25 = vector.shape_cast %24 : vector<1x64x16xf32> to vector<64x16xf32>
    %26 = vector.shape_cast %23 : vector<64x16xf32> to vector<1x64x16xf32>
    tpu.vector_store %arg3[%c0_10, %c0_11, %c0_12], %26 {strides = array<i32>} : memref<1x64x16xf32, #tpu.memory_space<vmem>>, vector<1x64x16xf32>,
    return
  }
  func.func @transform_0(%arg0: i32) -> (i32, i32, i32) {
    %c0_i32 = arith.constant 0 : i32
    %c0_i32_0 = arith.constant 0 : i32
    %c0_i32_1 = arith.constant 0 : i32
    return %arg0, %c0_i32, %c0_i32_0 : i32, i32, i32
  }
  func.func @transform_1(%arg0: i32) -> (i32, i32) {
    %c0_i32 = arith.constant 0 : i32
    %c0_i32_0 = arith.constant 0 : i32
    %c0_i32_1 = arith.constant 0 : i32
    return %c0_i32, %c0_i32_0 : i32, i32
  }
  func.func @transform_2(%arg0: i32) -> (i32, i32, i32) {
    %c0_i32 = arith.constant 0 : i32
    %c0_i32_0 = arith.constant 0 : i32
    %c0_i32_1 = arith.constant 0 : i32
    return %arg0, %c0_i32, %c0_i32_0 : i32, i32, i32
  }
}

</mosaic_0001>

<llo_original>
// kernel: discriminator_forward.4
$region0: #{discriminator_forward.4}
  #allocation0 [shape = 'u32[]', space=smem, size = 0x4, offset = 0x4, fixed_abs, tag = 'smem constant byte address 0x4 - core index']
  #allocation1 [shape = 'u32[72,128]{1,0:T(1,128)}', space=vmem, size = 0x9000, scoped, tag = 'internal scratch']
  %s0 = inlined_call_operand.vmem [shape: bf16[2,48,1024], index: 0, kind: input, shape index: {}]
  %s1 = inlined_call_operand.vmem [shape: bf16[8,48], index: 1, kind: input, shape index: {}]
  %s2 = inlined_call_operand.vmem [shape: f32[2,8,1024], index: 2, kind: output, shape index: {}]
  %s3 = sld [smem:[#allocation0]]
  $region41: #{discriminator_forward.4} parent=0
    _
  %s5 = ssub.s32 1, %s3
  %s6 = scalar_select 0, %s5, %s3
  loop: start=0, step=1, limit=4
  $region2: #{discriminator_forward.4} parent=0 // loop_pre_header
    _
  $region3: #{discriminator_forward.4} parent=0 // loop_header
    %s8 = sphi 0, %s12
    %p9 = scmp.ge.s32.totalorder %s8, 4
    %s18 = sphi 0, %s20
    %s21 = sphi 0, %s18
    %s22 = sphi 0, %s21
    %s38 = sphi 0, %s22
    %s42 = sphi 0, %s42
    %s44 = sphi 0, %s42
    %s45 = sphi 0, %s44
    %s59 = sphi 0, %s45
    %s65 = sphi 0, %s67
    %s68 = sphi 0, %s65
    %s69 = sphi 0, %s68
    %s85 = sphi 0, %s69
  $region4: #{discriminator_forward.4} parent=0 // loop_header_branch
    %11 = sbr.rel (%p9) target = $region8
  $region5: #{discriminator_forward.4} parent=0 // loop_body
    %s13 = ssub.s32 %s8, 1
    %s14 = ssub.s32 %s8, 2
    %s15 = sadd.s32 %s8, 1
    %s16 = ssub.s32 %s8, %s15
    %p17 = scmp.eq.s32.totalorder %s16, 0
    %s19 = sadd.s32 %s18, 1
    %s20 = scalar_select %p17, %s18, %s19
    %p23 = pneg %p17
    %p24 = scmp.eq.s32.totalorder %s8, 1
    %p25 = por %p23, %p24
    %p26 = scmp.ne.s32.totalorder %s18, %s21
    %p27 = scmp.eq.s32.totalorder %s8, 0
    %p28 = por %p26, %p27
    %p29 = scmp.ne.s32.totalorder %s18, %s21
    %p30 = scmp.eq.s32.totalorder %s13, 1
    %p31 = por %p29, %p30
    %p32 = scmp.ne.s32.totalorder %s21, %s22
    %p33 = scmp.eq.s32.totalorder %s13, 0
    %p34 = por %p32, %p33
    %p35 = scmp.ne.s32.totalorder %s21, %s22
    %p36 = scmp.eq.s32.totalorder %s14, 1
    %p37 = por %p35, %p36
    %p39 = scmp.ne.s32.totalorder %s22, %s38
    %p40 = scmp.eq.s32.totalorder %s14, 0
    %p41 = por %p39, %p40
    %s43 = sadd.s32 %s42, 1
    %p46 = scmp.eq.s32.totalorder %s8, 1
    %p47 = scmp.ne.s32.totalorder %s42, %s44
    %p48 = scmp.eq.s32.totalorder %s8, 0
    %p49 = por %p47, %p48
    %p50 = scmp.ne.s32.totalorder %s42, %s44
    %p51 = scmp.eq.s32.totalorder %s13, 1
    %p52 = por %p50, %p51
    %p53 = scmp.ne.s32.totalorder %s44, %s45
    %p54 = scmp.eq.s32.totalorder %s13, 0
    %p55 = por %p53, %p54
    %p56 = scmp.ne.s32.totalorder %s44, %s45
    %p57 = scmp.eq.s32.totalorder %s14, 1
    %p58 = por %p56, %p57
    %p60 = scmp.ne.s32.totalorder %s45, %s59
    %p61 = scmp.eq.s32.totalorder %s14, 0
    %p62 = por %p60, %p61
    %s63 = ssub.s32 %s8, %s15
    %p64 = scmp.eq.s32.totalorder %s63, 0
    %s66 = sadd.s32 %s65, 1
    %s67 = scalar_select %p64, %s65, %s66
    %p70 = pneg %p64
    %p71 = scmp.eq.s32.totalorder %s8, 1
    %p72 = por %p70, %p71
    %p73 = scmp.ne.s32.totalorder %s65, %s68
    %p74 = scmp.eq.s32.totalorder %s8, 0
    %p75 = por %p73, %p74
    %p76 = scmp.ne.s32.totalorder %s65, %s68
    %p77 = scmp.eq.s32.totalorder %s13, 1
    %p78 = por %p76, %p77
    %p79 = scmp.ne.s32.totalorder %s68, %s69
    %p80 = scmp.eq.s32.totalorder %s13, 0
    %p81 = por %p79, %p80
    %p82 = scmp.ne.s32.totalorder %s68, %s69
    %p83 = scmp.eq.s32.totalorder %s14, 1
    %p84 = por %p82, %p83
    %p86 = scmp.ne.s32.totalorder %s69, %s85
    %p87 = scmp.eq.s32.totalorder %s14, 0
    %p88 = por %p86, %p87
    %p89 = scmp.le.s32.totalorder 1, %s8
    %p90 = scmp.lt.s32.totalorder %s8, 3
    %p91 = pnand %p89, %p90
    %p92 = pneg %p91
    // Predicated region
    $region9: #{discriminator_forward.4} parent=5 // pred_check
      _
    $region10: #{discriminator_forward.4} parent=5 // pred_check_branch
      %94 = sbr.rel (%p91) target = $region12
    $region11: #{discriminator_forward.4} parent=5 // pred_region
      %s95 = ssub.s32 %s8, 1
      // Predicated region
      $region13: #{discriminator_forward.4} parent=11 // pred_check
        %p96 = pneg %p55
      $region14: #{discriminator_forward.4} parent=11 // pred_check_branch
        %98 = sbr.rel (%p96) target = $region16
      $region15: #{discriminator_forward.4} parent=11 // pred_region
        _
      $region16: #{discriminator_forward.4} parent=11 // pred_fallthru
        _
    $region12: #{discriminator_forward.4} parent=5 // pred_fallthru
      _
    %p99 = scmp.lt.s32.totalorder %s8, 2
    // Predicated region
    $region17: #{discriminator_forward.4} parent=5 // pred_check
      %p100 = pneg %p99
    $region18: #{discriminator_forward.4} parent=5 // pred_check_branch
      %102 = sbr.rel (%p100) target = $region20
    $region19: #{discriminator_forward.4} parent=5 // pred_region
      // Predicated region
      $region21: #{discriminator_forward.4} parent=19 // pred_check
        %p103 = pneg %p28
      $region22: #{discriminator_forward.4} parent=19 // pred_check_branch
        %105 = sbr.rel (%p103) target = $region24
      $region23: #{discriminator_forward.4} parent=19 // pred_region
        %p106 = scmp.lt.s32.totalorder %s8, 1
        %s107 = scalar_select %p106, %s8, 1
        %s108 = smul.addr %s107, 48
        %s109 = smul.addr %s108, 4
        %s110 = scalar_lea.vmem %s0, %s109
      $region24: #{discriminator_forward.4} parent=19 // pred_fallthru
        _
    $region20: #{discriminator_forward.4} parent=5 // pred_fallthru
      _
    %p111 = scmp.le.s32.totalorder 1, %s8
    %p112 = scmp.lt.s32.totalorder %s8, 3
    %p113 = pnand %p111, %p112
    %p114 = pneg %p113
    // Predicated region
    $region25: #{discriminator_forward.4} parent=5 // pred_check
      _
    $region26: #{discriminator_forward.4} parent=5 // pred_check_branch
      %116 = sbr.rel (%p113) target = $region28
    $region27: #{discriminator_forward.4} parent=5 // pred_region
      %s117 = ssub.s32 %s8, 1
      %p118 = scmp.lt.s32.totalorder %s13, 1
      %s119 = scalar_select %p118, %s13, 1
      %s120 = smul.addr %s119, 48
      %s121 = smul.addr %s120, 4
      %s122 = scalar_lea.vmem %s0, %s121
      %p123 = pneg %p34
      %p124 = pneg %p31
      %p125 = pneg %p55
      %p126 = pneg %p52
      %p127 = pneg %p81
      %p128 = pneg %p78
      %p129 = scmp.lt.s32.totalorder %s13, 1
      %s130 = scalar_select %p129, %s13, 1
      %s131 = smul.addr %s130, 8
      %s132 = smul.addr %s131, 8
      %s133 = scalar_lea.vmem %s2, %s132
      %p134 = scmp.lt.s32.totalorder %s13, 1
      %s135 = scalar_select %p134, %s13, 1
      %s136 = smul.addr %s135, 48
      %s137 = smul.addr %s136, 4
      %s138 = scalar_lea.vmem %s0, %s137
      %p139 = scmp.lt.s32.totalorder %s13, 1
      %s140 = scalar_select %p139, %s13, 1
      %s141 = smul.addr %s140, 8
      %s142 = smul.addr %s141, 8
      %s143 = scalar_lea.vmem %s2, %s142
      %v145 = vld [vmem:[%s1] sm:$0xf]
      %v146 = vld [vmem:[%s138] sm:$0xff]
      %v147 = vld [vmem:[%s138 + $0x8] sm:$0xff]
      %v148 = vld [vmem:[%s138 + $0x10] sm:$0xff]
      %v149 = vld [vmem:[%s138 + $0x18] sm:$0xff]
      %v150 = vld [vmem:[%s138 + $0x20] sm:$0xff]
      %v151 = vld [vmem:[%s138 + $0x28] sm:$0xff]
      %v152 = vld [vmem:[%s138 + $0x30] sm:$0xff]
      %v153 = vld [vmem:[%s138 + $0x38] sm:$0xff]
      %v154 = vld [vmem:[%s138 + $0x40] sm:$0xff]
      %v155 = vld [vmem:[%s138 + $0x48] sm:$0xff]
      %v156 = vld [vmem:[%s138 + $0x50] sm:$0xff]
      %v157 = vld [vmem:[%s138 + $0x58] sm:$0xff]
      %v158 = vld [vmem:[%s138 + $0x60] sm:$0xff]
      %v159 = vld [vmem:[%s138 + $0x68] sm:$0xff]
      %v160 = vld [vmem:[%s138 + $0x70] sm:$0xff]
      %v161 = vld [vmem:[%s138 + $0x78] sm:$0xff]
      %v162 = vld [vmem:[%s138 + $0x80] sm:$0xff]
      %v163 = vld [vmem:[%s138 + $0x88] sm:$0xff]
      %v164 = vld [vmem:[%s138 + $0x90] sm:$0xff]
      %v165 = vld [vmem:[%s138 + $0x98] sm:$0xff]
      %v166 = vld [vmem:[%s138 + $0xa0] sm:$0xff]
      %v167 = vld [vmem:[%s138 + $0xa8] sm:$0xff]
      %v168 = vld [vmem:[%s138 + $0xb0] sm:$0xff]
      %v169 = vld [vmem:[%s138 + $0xb8] sm:$0xff]
      %v194 = vunpack.c.l.b16 %v146
      %v195 = vunpack.c.h.b16 %v146
      %v196 = vunpack.c.l.b16 %v147
      %v197 = vunpack.c.h.b16 %v147
      %v198 = vunpack.c.l.b16 %v148
      %v199 = vunpack.c.h.b16 %v148
      %v200 = vunpack.c.l.b16 %v149
      %v201 = vunpack.c.h.b16 %v149
      %v202 = vunpack.c.l.b16 %v150
      %v203 = vunpack.c.h.b16 %v150
      %v204 = vunpack.c.l.b16 %v151
      %v205 = vunpack.c.h.b16 %v151
      %v206 = vunpack.c.l.b16 %v152
      %v207 = vunpack.c.h.b16 %v152
      %v208 = vunpack.c.l.b16 %v153
      %v209 = vunpack.c.h.b16 %v153
      %v210 = vunpack.c.l.b16 %v154
      %v211 = vunpack.c.h.b16 %v154
      %v212 = vunpack.c.l.b16 %v155
      %v213 = vunpack.c.h.b16 %v155
      %v214 = vunpack.c.l.b16 %v156
      %v215 = vunpack.c.h.b16 %v156
      %v216 = vunpack.c.l.b16 %v157
      %v217 = vunpack.c.h.b16 %v157
      %v218 = vunpack.c.l.b16 %v158
      %v219 = vunpack.c.h.b16 %v158
      %v220 = vunpack.c.l.b16 %v159
      %v221 = vunpack.c.h.b16 %v159
      %v222 = vunpack.c.l.b16 %v160
      %v223 = vunpack.c.h.b16 %v160
      %v224 = vunpack.c.l.b16 %v161
      %v225 = vunpack.c.h.b16 %v161
      %v226 = vunpack.c.l.b16 %v162
      %v227 = vunpack.c.h.b16 %v162
      %v228 = vunpack.c.l.b16 %v163
      %v229 = vunpack.c.h.b16 %v163
      %v230 = vunpack.c.l.b16 %v164
      %v231 = vunpack.c.h.b16 %v164
      %v232 = vunpack.c.l.b16 %v165
      %v233 = vunpack.c.h.b16 %v165
      %v234 = vunpack.c.l.b16 %v166
      %v235 = vunpack.c.h.b16 %v166
      %v236 = vunpack.c.l.b16 %v167
      %v237 = vunpack.c.h.b16 %v167
      %v238 = vunpack.c.l.b16 %v168
      %v239 = vunpack.c.h.b16 %v168
      %v240 = vunpack.c.l.b16 %v169
      %v241 = vunpack.c.h.b16 %v169
      %v242 = vpack.c.b16 %v202, %v194
      %v243 = vpack.c.b16 %v203, %v195
      %v244 = vpack.c.b16 %v204, %v196
      %v245 = vpack.c.b16 %v205, %v197
      %v246 = vpack.c.b16 %v206, %v198
      %v247 = vpack.c.b16 %v207, %v199
      %v248 = vpack.c.b16 %v208, %v200
      %v249 = vpack.c.b16 %v209, %v201
      %v250 = vpack.c.b16 %v218, %v210
      %v251 = vpack.c.b16 %v219, %v211
      %v252 = vpack.c.b16 %v220, %v212
      %v253 = vpack.c.b16 %v221, %v213
      %v254 = vpack.c.b16 %v222, %v214
      %v255 = vpack.c.b16 %v223, %v215
      %v256 = vpack.c.b16 %v224, %v216
      %v257 = vpack.c.b16 %v225, %v217
      %v258 = vpack.c.b16 %v234, %v226
      %v259 = vpack.c.b16 %v235, %v227
      %v260 = vpack.c.b16 %v236, %v228
      %v261 = vpack.c.b16 %v237, %v229
      %v262 = vpack.c.b16 %v238, %v230
      %v263 = vpack.c.b16 %v239, %v231
      %v264 = vpack.c.b16 %v240, %v232
      %v265 = vpack.c.b16 %v241, %v233
      %vm290 = vcmask 392192
      %v292 = vsel %vm290, %v145, 0
      %294 = vmatpush.bf16.msra.mxu0 0
      %295 = vmatpush.bf16.msra.mxu0 0
      %296 = vmatpush.bf16.msra.mxu0 0
      %297 = vmatpush.bf16.msra.mxu0 0
      %298 = vmatpush.bf16.msra.mxu0 0
      %299 = vmatpush.bf16.msra.mxu0 %v258
      %300 = vmatpush.bf16.msra.mxu0 %v250
      %301 = vmatpush.bf16.msra.mxu0 %v242
      %302 = vmatmul.bf16.gmra.mxu0 %v292
      %v303 = vpop.f32.mrf.mxu0
      %v304 = vadd.f32 0.0, %v303
      %v305 = vpop.f32.mrf.mxu0
      %306 = vdwg.mxu0
      %307 = vmatpush.bf16.msra.mxu0 0
      %308 = vmatpush.bf16.msra.mxu0 0
      %309 = vmatpush.bf16.msra.mxu0 0
      %310 = vmatpush.bf16.msra.mxu0 0
      %311 = vmatpush.bf16.msra.mxu0 0
      %312 = vmatpush.bf16.msra.mxu0 %v259
      %313 = vmatpush.bf16.msra.mxu0 %v251
      %314 = vmatpush.bf16.msra.mxu0 %v243
      %315 = vmatmul.bf16.gmra.mxu0 %v292
      %v316 = vpop.f32.mrf.mxu0
      %v317 = vadd.f32 0.0, %v316
      %v318 = vpop.f32.mrf.mxu0
      %319 = vdwg.mxu0
      %320 = vmatpush.bf16.msra.mxu0 0
      %321 = vmatpush.bf16.msra.mxu0 0
      %322 = vmatpush.bf16.msra.mxu0 0
      %323 = vmatpush.bf16.msra.mxu0 0
      %324 = vmatpush.bf16.msra.mxu0 0
      %325 = vmatpush.bf16.msra.mxu0 %v260
      %326 = vmatpush.bf16.msra.mxu0 %v252
      %327 = vmatpush.bf16.msra.mxu0 %v244
      %328 = vmatmul.bf16.gmra.mxu0 %v292
      %v329 = vpop.f32.mrf.mxu0
      %v330 = vadd.f32 0.0, %v329
      %v331 = vpop.f32.mrf.mxu0
      %332 = vdwg.mxu0
      %333 = vmatpush.bf16.msra.mxu0 0
      %334 = vmatpush.bf16.msra.mxu0 0
      %335 = vmatpush.bf16.msra.mxu0 0
      %336 = vmatpush.bf16.msra.mxu0 0
      %337 = vmatpush.bf16.msra.mxu0 0
      %338 = vmatpush.bf16.msra.mxu0 %v261
      %339 = vmatpush.bf16.msra.mxu0 %v253
      %340 = vmatpush.bf16.msra.mxu0 %v245
      %341 = vmatmul.bf16.gmra.mxu0 %v292
      %v342 = vpop.f32.mrf.mxu0
      %v343 = vadd.f32 0.0, %v342
      %v344 = vpop.f32.mrf.mxu0
      %345 = vdwg.mxu0
      %346 = vmatpush.bf16.msra.mxu0 0
      %347 = vmatpush.bf16.msra.mxu0 0
      %348 = vmatpush.bf16.msra.mxu0 0
      %349 = vmatpush.bf16.msra.mxu0 0
      %350 = vmatpush.bf16.msra.mxu0 0
      %351 = vmatpush.bf16.msra.mxu0 %v262
      %352 = vmatpush.bf16.msra.mxu0 %v254
      %353 = vmatpush.bf16.msra.mxu0 %v246
      %354 = vmatmul.bf16.gmra.mxu0 %v292
      %v355 = vpop.f32.mrf.mxu0
      %v356 = vadd.f32 0.0, %v355
      %v357 = vpop.f32.mrf.mxu0
      %358 = vdwg.mxu0
      %359 = vmatpush.bf16.msra.mxu0 0
      %360 = vmatpush.bf16.msra.mxu0 0
      %361 = vmatpush.bf16.msra.mxu0 0
      %362 = vmatpush.bf16.msra.mxu0 0
      %363 = vmatpush.bf16.msra.mxu0 0
      %364 = vmatpush.bf16.msra.mxu0 %v263
      %365 = vmatpush.bf16.msra.mxu0 %v255
      %366 = vmatpush.bf16.msra.mxu0 %v247
      %367 = vmatmul.bf16.gmra.mxu0 %v292
      %v368 = vpop.f32.mrf.mxu0
      %v369 = vadd.f32 0.0, %v368
      %v370 = vpop.f32.mrf.mxu0
      %371 = vdwg.mxu0
      %372 = vmatpush.bf16.msra.mxu0 0
      %373 = vmatpush.bf16.msra.mxu0 0
      %374 = vmatpush.bf16.msra.mxu0 0
      %375 = vmatpush.bf16.msra.mxu0 0
      %376 = vmatpush.bf16.msra.mxu0 0
      %377 = vmatpush.bf16.msra.mxu0 %v264
      %378 = vmatpush.bf16.msra.mxu0 %v256
      %379 = vmatpush.bf16.msra.mxu0 %v248
      %380 = vmatmul.bf16.gmra.mxu0 %v292
      %v381 = vpop.f32.mrf.mxu0
      %v382 = vadd.f32 0.0, %v381
      %v383 = vpop.f32.mrf.mxu0
      %384 = vdwg.mxu0
      %385 = vmatpush.bf16.msra.mxu0 0
      %386 = vmatpush.bf16.msra.mxu0 0
      %387 = vmatpush.bf16.msra.mxu0 0
      %388 = vmatpush.bf16.msra.mxu0 0
      %389 = vmatpush.bf16.msra.mxu0 0
      %390 = vmatpush.bf16.msra.mxu0 %v265
      %391 = vmatpush.bf16.msra.mxu0 %v257
      %392 = vmatpush.bf16.msra.mxu0 %v249
      %393 = vmatmul.bf16.gmra.mxu0 %v292
      %v394 = vpop.f32.mrf.mxu0
      %v395 = vadd.f32 0.0, %v394
      %v396 = vpop.f32.mrf.mxu0
      %397 = vdwg.mxu0
      %v398 = vadd.f32 %v304, %v317
      %v399 = vadd.f32 %v398, %v330
      %v400 = vadd.f32 %v399, %v343
      %v401 = vadd.f32 %v400, %v356
      %v402 = vadd.f32 %v401, %v369
      %v403 = vadd.f32 %v402, %v382
      %v404 = vadd.f32 %v403, %v395
      %405 = vadd.xlane.f32.xlu0 %v404
      %v406 = vpop.xlane.xlu0 %405
      %v407 = vmul.f32 %v304, %v304
      %v408 = vmul.f32 %v317, %v317
      %v409 = vmul.f32 %v330, %v330
      %v410 = vmul.f32 %v343, %v343
      %v411 = vmul.f32 %v356, %v356
      %v412 = vmul.f32 %v369, %v369
      %v413 = vmul.f32 %v382, %v382
      %v414 = vmul.f32 %v395, %v395
      %v415 = vadd.f32 %v407, %v408
      %v416 = vadd.f32 %v415, %v409
      %v417 = vadd.f32 %v416, %v410
      %v418 = vadd.f32 %v417, %v411
      %v419 = vadd.f32 %v418, %v412
      %v420 = vadd.f32 %v419, %v413
      %v421 = vadd.f32 %v420, %v414
      %422 = vadd.xlane.f32.xlu0 %v421
      %v423 = vpop.xlane.xlu0 %422
      %v424 = vmul.f32 %v406, 0.0009765625
      %v425 = vmul.f32 %v423, 0.0009765625
      %v426 = vmul.f32 %v424, %v424
      %v427 = vsub.f32 %v425, %v426
      %v428 = vadd.f32 %v427, 1e-05
      %v429 = vrsqrt.pop %v428
      %v430 = vmul.f32 %v429, %v428
      %v431 = vmul.f32 %v430, %v429
      %v432 = vmul.f32 0.5, %v431
      %v433 = vsub.f32 1.5, %v432
      %v434 = vmul.f32 %v429, %v433
      %vm435 = vweird.f32 %v428
      %vm436 = vweird.f32 %v429
      %vm437 = vmor %vm435, %vm436
      %v438 = vsel %vm437, %v429, %v434
      %v439 = vsub.f32 %v304, %v424
      %v440 = vsub.f32 %v317, %v424
      %v441 = vsub.f32 %v330, %v424
      %v442 = vsub.f32 %v343, %v424
      %v443 = vsub.f32 %v356, %v424
      %v444 = vsub.f32 %v369, %v424
      %v445 = vsub.f32 %v382, %v424
      %v446 = vsub.f32 %v395, %v424
      %v447 = vmul.f32 %v439, %v438
      %v448 = vmul.f32 %v440, %v438
      %v449 = vmul.f32 %v441, %v438
      %v450 = vmul.f32 %v442, %v438
      %v451 = vmul.f32 %v443, %v438
      %v452 = vmul.f32 %v444, %v438
      %v453 = vmul.f32 %v445, %v438
      %v454 = vmul.f32 %v446, %v438
      %v455 = vmax.f32 %v447, 0.0
      %v456 = vmax.f32 %v448, 0.0
      %v457 = vmax.f32 %v449, 0.0
      %v458 = vmax.f32 %v450, 0.0
      %v459 = vmax.f32 %v451, 0.0
      %v460 = vmax.f32 %v452, 0.0
      %v461 = vmax.f32 %v453, 0.0
      %v462 = vmax.f32 %v454, 0.0
      %463 = vst [vmem:[%s143] sm:$0xff] %v455
      %464 = vst [vmem:[%s143 + $0x8] sm:$0xff] %v456
      %465 = vst [vmem:[%s143 + $0x10] sm:$0xff] %v457
      %466 = vst [vmem:[%s143 + $0x18] sm:$0xff] %v458
      %467 = vst [vmem:[%s143 + $0x20] sm:$0xff] %v459
      %468 = vst [vmem:[%s143 + $0x28] sm:$0xff] %v460
      %469 = vst [vmem:[%s143 + $0x30] sm:$0xff] %v461
      %470 = vst [vmem:[%s143 + $0x38] sm:$0xff] %v462
      %p471 = scmp.lt.s32.totalorder %s13, 1
      %s472 = scalar_select %p471, %s13, 1
      %s473 = smul.addr %s472, 8
      %s474 = smul.addr %s473, 8
      %s475 = scalar_lea.vmem %s2, %s474
      // Predicated region
      $region29: #{discriminator_forward.4} parent=27 // pred_check
        %p476 = pneg %p78
      $region30: #{discriminator_forward.4} parent=27 // pred_check_branch
        %478 = sbr.rel (%p476) target = $region32
      $region31: #{discriminator_forward.4} parent=27 // pred_region
        _
      $region32: #{discriminator_forward.4} parent=27 // pred_fallthru
        _
    $region28: #{discriminator_forward.4} parent=5 // pred_fallthru
      _
    %p479 = scmp.le.s32.totalorder 2, %s8
    // Predicated region
    $region33: #{discriminator_forward.4} parent=5 // pred_check
      %p480 = pneg %p479
    $region34: #{discriminator_forward.4} parent=5 // pred_check_branch
      %482 = sbr.rel (%p480) target = $region36
    $region35: #{discriminator_forward.4} parent=5 // pred_region
      %s483 = ssub.s32 %s8, 2
      // Predicated region
      $region37: #{discriminator_forward.4} parent=35 // pred_check
        %p484 = pneg %p84
      $region38: #{discriminator_forward.4} parent=35 // pred_check_branch
        %486 = sbr.rel (%p484) target = $region40
      $region39: #{discriminator_forward.4} parent=35 // pred_region
        %p487 = scmp.lt.s32.totalorder %s14, 1
        %s488 = scalar_select %p487, %s14, 1
        %s489 = smul.addr %s488, 8
        %s490 = smul.addr %s489, 8
        %s491 = scalar_lea.vmem %s2, %s490
      $region40: #{discriminator_forward.4} parent=35 // pred_fallthru
        _
    $region36: #{discriminator_forward.4} parent=5 // pred_fallthru
      _
  $region6: #{discriminator_forward.4} parent=0 // loop_footer
    %s12 = sadd.s32 1, %s8
  $region7: #{discriminator_forward.4} parent=0 // loop_footer_branch
    %7 = sbr.rel target = $region3
  $region8: #{discriminator_forward.4} parent=0 // loop_exit
    _

// kernel: discriminator_forward.5
$region0: #{discriminator_forward.5}
  #allocation0 [shape = 'u32[]', space=smem, size = 0x4, offset = 0x4, fixed_abs, tag = 'smem constant byte address 0x4 - core index']
  #allocation1 [shape = 'u32[72,128]{1,0:T(1,128)}', space=vmem, size = 0x9000, scoped, tag = 'internal scratch']
  %s0 = inlined_call_operand.vmem [shape: bf16[2,128,256], index: 0, kind: input, shape index: {}]
  %s1 = inlined_call_operand.vmem [shape: bf16[16,128], index: 1, kind: input, shape index: {}]
  %s2 = inlined_call_operand.vmem [shape: f32[2,16,256], index: 2, kind: output, shape index: {}]
  %s3 = sld [smem:[#allocation0]]
  $region41: #{discriminator_forward.5} parent=0
    _
  %s5 = ssub.s32 1, %s3
  %s6 = scalar_select 0, %s5, %s3
  loop: start=0, step=1, limit=4
  $region2: #{discriminator_forward.5} parent=0 // loop_pre_header
    _
  $region3: #{discriminator_forward.5} parent=0 // loop_header
    %s8 = sphi 0, %s12
    %p9 = scmp.ge.s32.totalorder %s8, 4
    %s18 = sphi 0, %s20
    %s21 = sphi 0, %s18
    %s22 = sphi 0, %s21
    %s38 = sphi 0, %s22
    %s42 = sphi 0, %s42
    %s44 = sphi 0, %s42
    %s45 = sphi 0, %s44
    %s59 = sphi 0, %s45
    %s65 = sphi 0, %s67
    %s68 = sphi 0, %s65
    %s69 = sphi 0, %s68
    %s85 = sphi 0, %s69
  $region4: #{discriminator_forward.5} parent=0 // loop_header_branch
    %11 = sbr.rel (%p9) target = $region8
  $region5: #{discriminator_forward.5} parent=0 // loop_body
    %s13 = ssub.s32 %s8, 1
    %s14 = ssub.s32 %s8, 2
    %s15 = sadd.s32 %s8, 1
    %s16 = ssub.s32 %s8, %s15
    %p17 = scmp.eq.s32.totalorder %s16, 0
    %s19 = sadd.s32 %s18, 1
    %s20 = scalar_select %p17, %s18, %s19
    %p23 = pneg %p17
    %p24 = scmp.eq.s32.totalorder %s8, 1
    %p25 = por %p23, %p24
    %p26 = scmp.ne.s32.totalorder %s18, %s21
    %p27 = scmp.eq.s32.totalorder %s8, 0
    %p28 = por %p26, %p27
    %p29 = scmp.ne.s32.totalorder %s18, %s21
    %p30 = scmp.eq.s32.totalorder %s13, 1
    %p31 = por %p29, %p30
    %p32 = scmp.ne.s32.totalorder %s21, %s22
    %p33 = scmp.eq.s32.totalorder %s13, 0
    %p34 = por %p32, %p33
    %p35 = scmp.ne.s32.totalorder %s21, %s22
    %p36 = scmp.eq.s32.totalorder %s14, 1
    %p37 = por %p35, %p36
    %p39 = scmp.ne.s32.totalorder %s22, %s38
    %p40 = scmp.eq.s32.totalorder %s14, 0
    %p41 = por %p39, %p40
    %s43 = sadd.s32 %s42, 1
    %p46 = scmp.eq.s32.totalorder %s8, 1
    %p47 = scmp.ne.s32.totalorder %s42, %s44
    %p48 = scmp.eq.s32.totalorder %s8, 0
    %p49 = por %p47, %p48
    %p50 = scmp.ne.s32.totalorder %s42, %s44
    %p51 = scmp.eq.s32.totalorder %s13, 1
    %p52 = por %p50, %p51
    %p53 = scmp.ne.s32.totalorder %s44, %s45
    %p54 = scmp.eq.s32.totalorder %s13, 0
    %p55 = por %p53, %p54
    %p56 = scmp.ne.s32.totalorder %s44, %s45
    %p57 = scmp.eq.s32.totalorder %s14, 1
    %p58 = por %p56, %p57
    %p60 = scmp.ne.s32.totalorder %s45, %s59
    %p61 = scmp.eq.s32.totalorder %s14, 0
    %p62 = por %p60, %p61
    %s63 = ssub.s32 %s8, %s15
    %p64 = scmp.eq.s32.totalorder %s63, 0
    %s66 = sadd.s32 %s65, 1
    %s67 = scalar_select %p64, %s65, %s66
    %p70 = pneg %p64
    %p71 = scmp.eq.s32.totalorder %s8, 1
    %p72 = por %p70, %p71
    %p73 = scmp.ne.s32.totalorder %s65, %s68
    %p74 = scmp.eq.s32.totalorder %s8, 0
    %p75 = por %p73, %p74
    %p76 = scmp.ne.s32.totalorder %s65, %s68
    %p77 = scmp.eq.s32.totalorder %s13, 1
    %p78 = por %p76, %p77
    %p79 = scmp.ne.s32.totalorder %s68, %s69
    %p80 = scmp.eq.s32.totalorder %s13, 0
    %p81 = por %p79, %p80
    %p82 = scmp.ne.s32.totalorder %s68, %s69
    %p83 = scmp.eq.s32.totalorder %s14, 1
    %p84 = por %p82, %p83
    %p86 = scmp.ne.s32.totalorder %s69, %s85
    %p87 = scmp.eq.s32.totalorder %s14, 0
    %p88 = por %p86, %p87
    %p89 = scmp.le.s32.totalorder 1, %s8
    %p90 = scmp.lt.s32.totalorder %s8, 3
    %p91 = pnand %p89, %p90
    %p92 = pneg %p91
    // Predicated region
    $region9: #{discriminator_forward.5} parent=5 // pred_check
      _
    $region10: #{discriminator_forward.5} parent=5 // pred_check_branch
      %94 = sbr.rel (%p91) target = $region12
    $region11: #{discriminator_forward.5} parent=5 // pred_region
      %s95 = ssub.s32 %s8, 1
      // Predicated region
      $region13: #{discriminator_forward.5} parent=11 // pred_check
        %p96 = pneg %p55
      $region14: #{discriminator_forward.5} parent=11 // pred_check_branch
        %98 = sbr.rel (%p96) target = $region16
      $region15: #{discriminator_forward.5} parent=11 // pred_region
        _
      $region16: #{discriminator_forward.5} parent=11 // pred_fallthru
        _
    $region12: #{discriminator_forward.5} parent=5 // pred_fallthru
      _
    %p99 = scmp.lt.s32.totalorder %s8, 2
    // Predicated region
    $region17: #{discriminator_forward.5} parent=5 // pred_check
      %p100 = pneg %p99
    $region18: #{discriminator_forward.5} parent=5 // pred_check_branch
      %102 = sbr.rel (%p100) target = $region20
    $region19: #{discriminator_forward.5} parent=5 // pred_region
      // Predicated region
      $region21: #{discriminator_forward.5} parent=19 // pred_check
        %p103 = pneg %p28
      $region22: #{discriminator_forward.5} parent=19 // pred_check_branch
        %105 = sbr.rel (%p103) target = $region24
      $region23: #{discriminator_forward.5} parent=19 // pred_region
        %p106 = scmp.lt.s32.totalorder %s8, 1
        %s107 = scalar_select %p106, %s8, 1
        %s108 = smul.addr %s107, 32
        %s109 = smul.addr %s108, 4
        %s110 = scalar_lea.vmem %s0, %s109
      $region24: #{discriminator_forward.5} parent=19 // pred_fallthru
        _
    $region20: #{discriminator_forward.5} parent=5 // pred_fallthru
      _
    %p111 = scmp.le.s32.totalorder 1, %s8
    %p112 = scmp.lt.s32.totalorder %s8, 3
    %p113 = pnand %p111, %p112
    %p114 = pneg %p113
    // Predicated region
    $region25: #{discriminator_forward.5} parent=5 // pred_check
      _
    $region26: #{discriminator_forward.5} parent=5 // pred_check_branch
      %116 = sbr.rel (%p113) target = $region28
    $region27: #{discriminator_forward.5} parent=5 // pred_region
      %s117 = ssub.s32 %s8, 1
      %p118 = scmp.lt.s32.totalorder %s13, 1
      %s119 = scalar_select %p118, %s13, 1
      %s120 = smul.addr %s119, 32
      %s121 = smul.addr %s120, 4
      %s122 = scalar_lea.vmem %s0, %s121
      %p123 = pneg %p34
      %p124 = pneg %p31
      %p125 = pneg %p55
      %p126 = pneg %p52
      %p127 = pneg %p81
      %p128 = pneg %p78
      %p129 = scmp.lt.s32.totalorder %s13, 1
      %s130 = scalar_select %p129, %s13, 1
      %s131 = smul.addr %s130, 4
      %s132 = smul.addr %s131, 8
      %s133 = scalar_lea.vmem %s2, %s132
      %p134 = scmp.lt.s32.totalorder %s13, 1
      %s135 = scalar_select %p134, %s13, 1
      %s136 = smul.addr %s135, 32
      %s137 = smul.addr %s136, 4
      %s138 = scalar_lea.vmem %s0, %s137
      %p139 = scmp.lt.s32.totalorder %s13, 1
      %s140 = scalar_select %p139, %s13, 1
      %s141 = smul.addr %s140, 4
      %s142 = smul.addr %s141, 8
      %s143 = scalar_lea.vmem %s2, %s142
      %v144 = vld [vmem:[%s1] sm:$0xf]
      %v145 = vld [vmem:[%s1 + $0x4] sm:$0xf]
      %v146 = vld [vmem:[%s138] sm:$0xff]
      %v147 = vld [vmem:[%s138 + $0x8] sm:$0xff]
      %v148 = vld [vmem:[%s138 + $0x10] sm:$0xff]
      %v149 = vld [vmem:[%s138 + $0x18] sm:$0xff]
      %v150 = vld [vmem:[%s138 + $0x20] sm:$0xff]
      %v151 = vld [vmem:[%s138 + $0x28] sm:$0xff]
      %v152 = vld [vmem:[%s138 + $0x30] sm:$0xff]
      %v153 = vld [vmem:[%s138 + $0x38] sm:$0xff]
      %v154 = vld [vmem:[%s138 + $0x40] sm:$0xff]
      %v155 = vld [vmem:[%s138 + $0x48] sm:$0xff]
      %v156 = vld [vmem:[%s138 + $0x50] sm:$0xff]
      %v157 = vld [vmem:[%s138 + $0x58] sm:$0xff]
      %v158 = vld [vmem:[%s138 + $0x60] sm:$0xff]
      %v159 = vld [vmem:[%s138 + $0x68] sm:$0xff]
      %v160 = vld [vmem:[%s138 + $0x70] sm:$0xff]
      %v161 = vld [vmem:[%s138 + $0x78] sm:$0xff]
      %v164 = vunpack.c.l.b16 %v144
      %v165 = vunpack.c.l.b16 %v145
      %v166 = vpack.c.b16 %v165, %v164
      %v184 = vunpack.c.l.b16 %v146
      %v185 = vunpack.c.h.b16 %v146
      %v186 = vunpack.c.l.b16 %v147
      %v187 = vunpack.c.h.b16 %v147
      %v188 = vunpack.c.l.b16 %v148
      %v189 = vunpack.c.h.b16 %v148
      %v190 = vunpack.c.l.b16 %v149
      %v191 = vunpack.c.h.b16 %v149
      %v192 = vunpack.c.l.b16 %v150
      %v193 = vunpack.c.h.b16 %v150
      %v194 = vunpack.c.l.b16 %v151
      %v195 = vunpack.c.h.b16 %v151
      %v196 = vunpack.c.l.b16 %v152
      %v197 = vunpack.c.h.b16 %v152
      %v198 = vunpack.c.l.b16 %v153
      %v199 = vunpack.c.h.b16 %v153
      %v200 = vunpack.c.l.b16 %v154
      %v201 = vunpack.c.h.b16 %v154
      %v202 = vunpack.c.l.b16 %v155
      %v203 = vunpack.c.h.b16 %v155
      %v204 = vunpack.c.l.b16 %v156
      %v205 = vunpack.c.h.b16 %v156
      %v206 = vunpack.c.l.b16 %v157
      %v207 = vunpack.c.h.b16 %v157
      %v208 = vunpack.c.l.b16 %v158
      %v209 = vunpack.c.h.b16 %v158
      %v210 = vunpack.c.l.b16 %v159
      %v211 = vunpack.c.h.b16 %v159
      %v212 = vunpack.c.l.b16 %v160
      %v213 = vunpack.c.h.b16 %v160
      %v214 = vunpack.c.l.b16 %v161
      %v215 = vunpack.c.h.b16 %v161
      %v216 = vpack.c.b16 %v186, %v184
      %v217 = vpack.c.b16 %v187, %v185
      %v218 = vpack.c.b16 %v190, %v188
      %v219 = vpack.c.b16 %v191, %v189
      %v220 = vpack.c.b16 %v194, %v192
      %v221 = vpack.c.b16 %v195, %v193
      %v222 = vpack.c.b16 %v198, %v196
      %v223 = vpack.c.b16 %v199, %v197
      %v224 = vpack.c.b16 %v202, %v200
      %v225 = vpack.c.b16 %v203, %v201
      %v226 = vpack.c.b16 %v206, %v204
      %v227 = vpack.c.b16 %v207, %v205
      %v228 = vpack.c.b16 %v210, %v208
      %v229 = vpack.c.b16 %v211, %v209
      %v230 = vpack.c.b16 %v214, %v212
      %v231 = vpack.c.b16 %v215, %v213
      %248 = vmatpush.bf16.msra.mxu0 %v230
      %249 = vmatpush.bf16.msra.mxu0 %v228
      %250 = vmatpush.bf16.msra.mxu0 %v226
      %251 = vmatpush.bf16.msra.mxu0 %v224
      %252 = vmatpush.bf16.msra.mxu0 %v222
      %253 = vmatpush.bf16.msra.mxu0 %v220
      %254 = vmatpush.bf16.msra.mxu0 %v218
      %255 = vmatpush.bf16.msra.mxu0 %v216
      %256 = vmatmul.bf16.gmra.mxu0 %v166
      %v257 = vpop.f32.mrf.mxu0
      %v258 = vadd.f32 0.0, %v257
      %v259 = vpop.f32.mrf.mxu0
      %v260 = vadd.f32 0.0, %v259
      %261 = vdwg.mxu0
      %262 = vmatpush.bf16.msra.mxu0 %v231
      %263 = vmatpush.bf16.msra.mxu0 %v229
      %264 = vmatpush.bf16.msra.mxu0 %v227
      %265 = vmatpush.bf16.msra.mxu0 %v225
      %266 = vmatpush.bf16.msra.mxu0 %v223
      %267 = vmatpush.bf16.msra.mxu0 %v221
      %268 = vmatpush.bf16.msra.mxu0 %v219
      %269 = vmatpush.bf16.msra.mxu0 %v217
      %270 = vmatmul.bf16.gmra.mxu0 %v166
      %v271 = vpop.f32.mrf.mxu0
      %v272 = vadd.f32 0.0, %v271
      %v273 = vpop.f32.mrf.mxu0
      %v274 = vadd.f32 0.0, %v273
      %275 = vdwg.mxu0
      %v276 = vadd.f32 %v258, %v272
      %277 = vadd.xlane.f32.xlu0 %v276
      %v278 = vpop.xlane.xlu0 %277
      %v279 = vadd.f32 %v260, %v274
      %280 = vadd.xlane.f32.xlu0 %v279
      %v281 = vpop.xlane.xlu0 %280
      %v282 = vmul.f32 %v258, %v258
      %v283 = vmul.f32 %v272, %v272
      %v284 = vmul.f32 %v260, %v260
      %v285 = vmul.f32 %v274, %v274
      %v286 = vadd.f32 %v282, %v283
      %287 = vadd.xlane.f32.xlu0 %v286
      %v288 = vpop.xlane.xlu0 %287
      %v289 = vadd.f32 %v284, %v285
      %290 = vadd.xlane.f32.xlu0 %v289
      %v291 = vpop.xlane.xlu0 %290
      %v292 = vmul.f32 %v278, 0.00390625
      %v293 = vmul.f32 %v281, 0.00390625
      %v294 = vmul.f32 %v288, 0.00390625
      %v295 = vmul.f32 %v291, 0.00390625
      %v296 = vmul.f32 %v292, %v292
      %v297 = vmul.f32 %v293, %v293
      %v298 = vsub.f32 %v294, %v296
      %v299 = vsub.f32 %v295, %v297
      %v300 = vadd.f32 %v298, 1e-05
      %v301 = vadd.f32 %v299, 1e-05
      %v302 = vrsqrt.pop %v300
      %v303 = vmul.f32 %v302, %v300
      %v304 = vmul.f32 %v303, %v302
      %v305 = vmul.f32 0.5, %v304
      %v306 = vsub.f32 1.5, %v305
      %v307 = vmul.f32 %v302, %v306
      %vm308 = vweird.f32 %v300
      %vm309 = vweird.f32 %v302
      %vm310 = vmor %vm308, %vm309
      %v311 = vsel %vm310, %v302, %v307
      %v312 = vrsqrt.pop %v301
      %v313 = vmul.f32 %v312, %v301
      %v314 = vmul.f32 %v313, %v312
      %v315 = vmul.f32 0.5, %v314
      %v316 = vsub.f32 1.5, %v315
      %v317 = vmul.f32 %v312, %v316
      %vm318 = vweird.f32 %v301
      %vm319 = vweird.f32 %v312
      %vm320 = vmor %vm318, %vm319
      %v321 = vsel %vm320, %v312, %v317
      %v322 = vsub.f32 %v258, %v292
      %v323 = vsub.f32 %v272, %v292
      %v324 = vsub.f32 %v260, %v293
      %v325 = vsub.f32 %v274, %v293
      %v326 = vmul.f32 %v322, %v311
      %v327 = vmul.f32 %v323, %v311
      %v328 = vmul.f32 %v324, %v321
      %v329 = vmul.f32 %v325, %v321
      %v330 = vmax.f32 %v326, 0.0
      %v331 = vmax.f32 %v327, 0.0
      %v332 = vmax.f32 %v328, 0.0
      %v333 = vmax.f32 %v329, 0.0
      %334 = vst [vmem:[%s143] sm:$0xff] %v330
      %335 = vst [vmem:[%s143 + $0x8] sm:$0xff] %v331
      %336 = vst [vmem:[%s143 + $0x10] sm:$0xff] %v332
      %337 = vst [vmem:[%s143 + $0x18] sm:$0xff] %v333
      %p338 = scmp.lt.s32.totalorder %s13, 1
      %s339 = scalar_select %p338, %s13, 1
      %s340 = smul.addr %s339, 4
      %s341 = smul.addr %s340, 8
      %s342 = scalar_lea.vmem %s2, %s341
      // Predicated region
      $region29: #{discriminator_forward.5} parent=27 // pred_check
        %p343 = pneg %p78
      $region30: #{discriminator_forward.5} parent=27 // pred_check_branch
        %345 = sbr.rel (%p343) target = $region32
      $region31: #{discriminator_forward.5} parent=27 // pred_region
        _
      $region32: #{discriminator_forward.5} parent=27 // pred_fallthru
        _
    $region28: #{discriminator_forward.5} parent=5 // pred_fallthru
      _
    %p346 = scmp.le.s32.totalorder 2, %s8
    // Predicated region
    $region33: #{discriminator_forward.5} parent=5 // pred_check
      %p347 = pneg %p346
    $region34: #{discriminator_forward.5} parent=5 // pred_check_branch
      %349 = sbr.rel (%p347) target = $region36
    $region35: #{discriminator_forward.5} parent=5 // pred_region
      %s350 = ssub.s32 %s8, 2
      // Predicated region
      $region37: #{discriminator_forward.5} parent=35 // pred_check
        %p351 = pneg %p84
      $region38: #{discriminator_forward.5} parent=35 // pred_check_branch
        %353 = sbr.rel (%p351) target = $region40
      $region39: #{discriminator_forward.5} parent=35 // pred_region
        %p354 = scmp.lt.s32.totalorder %s14, 1
        %s355 = scalar_select %p354, %s14, 1
        %s356 = smul.addr %s355, 4
        %s357 = smul.addr %s356, 8
        %s358 = scalar_lea.vmem %s2, %s357
      $region40: #{discriminator_forward.5} parent=35 // pred_fallthru
        _
    $region36: #{discriminator_forward.5} parent=5 // pred_fallthru
      _
  $region6: #{discriminator_forward.5} parent=0 // loop_footer
    %s12 = sadd.s32 1, %s8
  $region7: #{discriminator_forward.5} parent=0 // loop_footer_branch
    %7 = sbr.rel target = $region3
  $region8: #{discriminator_forward.5} parent=0 // loop_exit
    _

// kernel: discriminator_forward.6
$region0: #{discriminator_forward.6}
  #allocation0 [shape = 'u32[]', space=smem, size = 0x4, offset = 0x4, fixed_abs, tag = 'smem constant byte address 0x4 - core index']
  #allocation1 [shape = 'u32[72,128]{1,0:T(1,128)}', space=vmem, size = 0x9000, scoped, tag = 'internal scratch']
  %s0 = inlined_call_operand.vmem [shape: bf16[2,256,64], index: 0, kind: input, shape index: {}]
  %s1 = inlined_call_operand.vmem [shape: bf16[32,256], index: 1, kind: input, shape index: {}]
  %s2 = inlined_call_operand.vmem [shape: f32[2,32,64], index: 2, kind: output, shape index: {}]
  %s3 = sld [smem:[#allocation0]]
  $region41: #{discriminator_forward.6} parent=0
    _
  %s5 = ssub.s32 1, %s3
  %s6 = scalar_select 0, %s5, %s3
  loop: start=0, step=1, limit=4
  $region2: #{discriminator_forward.6} parent=0 // loop_pre_header
    _
  $region3: #{discriminator_forward.6} parent=0 // loop_header
    %s8 = sphi 0, %s12
    %p9 = scmp.ge.s32.totalorder %s8, 4
    %s18 = sphi 0, %s20
    %s21 = sphi 0, %s18
    %s22 = sphi 0, %s21
    %s38 = sphi 0, %s22
    %s42 = sphi 0, %s42
    %s44 = sphi 0, %s42
    %s45 = sphi 0, %s44
    %s59 = sphi 0, %s45
    %s65 = sphi 0, %s67
    %s68 = sphi 0, %s65
    %s69 = sphi 0, %s68
    %s85 = sphi 0, %s69
  $region4: #{discriminator_forward.6} parent=0 // loop_header_branch
    %11 = sbr.rel (%p9) target = $region8
  $region5: #{discriminator_forward.6} parent=0 // loop_body
    %s13 = ssub.s32 %s8, 1
    %s14 = ssub.s32 %s8, 2
    %s15 = sadd.s32 %s8, 1
    %s16 = ssub.s32 %s8, %s15
    %p17 = scmp.eq.s32.totalorder %s16, 0
    %s19 = sadd.s32 %s18, 1
    %s20 = scalar_select %p17, %s18, %s19
    %p23 = pneg %p17
    %p24 = scmp.eq.s32.totalorder %s8, 1
    %p25 = por %p23, %p24
    %p26 = scmp.ne.s32.totalorder %s18, %s21
    %p27 = scmp.eq.s32.totalorder %s8, 0
    %p28 = por %p26, %p27
    %p29 = scmp.ne.s32.totalorder %s18, %s21
    %p30 = scmp.eq.s32.totalorder %s13, 1
    %p31 = por %p29, %p30
    %p32 = scmp.ne.s32.totalorder %s21, %s22
    %p33 = scmp.eq.s32.totalorder %s13, 0
    %p34 = por %p32, %p33
    %p35 = scmp.ne.s32.totalorder %s21, %s22
    %p36 = scmp.eq.s32.totalorder %s14, 1
    %p37 = por %p35, %p36
    %p39 = scmp.ne.s32.totalorder %s22, %s38
    %p40 = scmp.eq.s32.totalorder %s14, 0
    %p41 = por %p39, %p40
    %s43 = sadd.s32 %s42, 1
    %p46 = scmp.eq.s32.totalorder %s8, 1
    %p47 = scmp.ne.s32.totalorder %s42, %s44
    %p48 = scmp.eq.s32.totalorder %s8, 0
    %p49 = por %p47, %p48
    %p50 = scmp.ne.s32.totalorder %s42, %s44
    %p51 = scmp.eq.s32.totalorder %s13, 1
    %p52 = por %p50, %p51
    %p53 = scmp.ne.s32.totalorder %s44, %s45
    %p54 = scmp.eq.s32.totalorder %s13, 0
    %p55 = por %p53, %p54
    %p56 = scmp.ne.s32.totalorder %s44, %s45
    %p57 = scmp.eq.s32.totalorder %s14, 1
    %p58 = por %p56, %p57
    %p60 = scmp.ne.s32.totalorder %s45, %s59
    %p61 = scmp.eq.s32.totalorder %s14, 0
    %p62 = por %p60, %p61
    %s63 = ssub.s32 %s8, %s15
    %p64 = scmp.eq.s32.totalorder %s63, 0
    %s66 = sadd.s32 %s65, 1
    %s67 = scalar_select %p64, %s65, %s66
    %p70 = pneg %p64
    %p71 = scmp.eq.s32.totalorder %s8, 1
    %p72 = por %p70, %p71
    %p73 = scmp.ne.s32.totalorder %s65, %s68
    %p74 = scmp.eq.s32.totalorder %s8, 0
    %p75 = por %p73, %p74
    %p76 = scmp.ne.s32.totalorder %s65, %s68
    %p77 = scmp.eq.s32.totalorder %s13, 1
    %p78 = por %p76, %p77
    %p79 = scmp.ne.s32.totalorder %s68, %s69
    %p80 = scmp.eq.s32.totalorder %s13, 0
    %p81 = por %p79, %p80
    %p82 = scmp.ne.s32.totalorder %s68, %s69
    %p83 = scmp.eq.s32.totalorder %s14, 1
    %p84 = por %p82, %p83
    %p86 = scmp.ne.s32.totalorder %s69, %s85
    %p87 = scmp.eq.s32.totalorder %s14, 0
    %p88 = por %p86, %p87
    %p89 = scmp.le.s32.totalorder 1, %s8
    %p90 = scmp.lt.s32.totalorder %s8, 3
    %p91 = pnand %p89, %p90
    %p92 = pneg %p91
    // Predicated region
    $region9: #{discriminator_forward.6} parent=5 // pred_check
      _
    $region10: #{discriminator_forward.6} parent=5 // pred_check_branch
      %94 = sbr.rel (%p91) target = $region12
    $region11: #{discriminator_forward.6} parent=5 // pred_region
      %s95 = ssub.s32 %s8, 1
      // Predicated region
      $region13: #{discriminator_forward.6} parent=11 // pred_check
        %p96 = pneg %p55
      $region14: #{discriminator_forward.6} parent=11 // pred_check_branch
        %98 = sbr.rel (%p96) target = $region16
      $region15: #{discriminator_forward.6} parent=11 // pred_region
        _
      $region16: #{discriminator_forward.6} parent=11 // pred_fallthru
        _
    $region12: #{discriminator_forward.6} parent=5 // pred_fallthru
      _
    %p99 = scmp.lt.s32.totalorder %s8, 2
    // Predicated region
    $region17: #{discriminator_forward.6} parent=5 // pred_check
      %p100 = pneg %p99
    $region18: #{discriminator_forward.6} parent=5 // pred_check_branch
      %102 = sbr.rel (%p100) target = $region20
    $region19: #{discriminator_forward.6} parent=5 // pred_region
      // Predicated region
      $region21: #{discriminator_forward.6} parent=19 // pred_check
        %p103 = pneg %p28
      $region22: #{discriminator_forward.6} parent=19 // pred_check_branch
        %105 = sbr.rel (%p103) target = $region24
      $region23: #{discriminator_forward.6} parent=19 // pred_region
        %p106 = scmp.lt.s32.totalorder %s8, 1
        %s107 = scalar_select %p106, %s8, 1
        %s108 = smul.addr %s107, 32
        %s109 = smul.addr %s108, 4
        %s110 = scalar_lea.vmem %s0, %s109
      $region24: #{discriminator_forward.6} parent=19 // pred_fallthru
        _
    $region20: #{discriminator_forward.6} parent=5 // pred_fallthru
      _
    %p111 = scmp.le.s32.totalorder 1, %s8
    %p112 = scmp.lt.s32.totalorder %s8, 3
    %p113 = pnand %p111, %p112
    %p114 = pneg %p113
    // Predicated region
    $region25: #{discriminator_forward.6} parent=5 // pred_check
      _
    $region26: #{discriminator_forward.6} parent=5 // pred_check_branch
      %116 = sbr.rel (%p113) target = $region28
    $region27: #{discriminator_forward.6} parent=5 // pred_region
      %s117 = ssub.s32 %s8, 1
      %p118 = scmp.lt.s32.totalorder %s13, 1
      %s119 = scalar_select %p118, %s13, 1
      %s120 = smul.addr %s119, 32
      %s121 = smul.addr %s120, 4
      %s122 = scalar_lea.vmem %s0, %s121
      %p123 = pneg %p34
      %p124 = pneg %p31
      %p125 = pneg %p55
      %p126 = pneg %p52
      %p127 = pneg %p81
      %p128 = pneg %p78
      %p129 = scmp.lt.s32.totalorder %s13, 1
      %s130 = scalar_select %p129, %s13, 1
      %s131 = smul.addr %s130, 4
      %s132 = smul.addr %s131, 8
      %s133 = scalar_lea.vmem %s2, %s132
      %p134 = scmp.lt.s32.totalorder %s13, 1
      %s135 = scalar_select %p134, %s13, 1
      %s136 = smul.addr %s135, 32
      %s137 = smul.addr %s136, 4
      %s138 = scalar_lea.vmem %s0, %s137
      %p139 = scmp.lt.s32.totalorder %s13, 1
      %s140 = scalar_select %p139, %s13, 1
      %s141 = smul.addr %s140, 4
      %s142 = smul.addr %s141, 8
      %s143 = scalar_lea.vmem %s2, %s142
      %v144 = vld [vmem:[%s1] sm:$0xff]
      %v145 = vld [vmem:[%s1 + $0x8] sm:$0xff]
      %v146 = vld [vmem:[%s1 + $0x10] sm:$0xff]
      %v147 = vld [vmem:[%s1 + $0x18] sm:$0xff]
      %v148 = vld [vmem:[%s138] sm:$0xf]
      %v149 = vld [vmem:[%s138 + $0x4] sm:$0xf]
      %v150 = vld [vmem:[%s138 + $0x8] sm:$0xf]
      %v151 = vld [vmem:[%s138 + $0xc] sm:$0xf]
      %v152 = vld [vmem:[%s138 + $0x10] sm:$0xf]
      %v153 = vld [vmem:[%s138 + $0x14] sm:$0xf]
      %v154 = vld [vmem:[%s138 + $0x18] sm:$0xf]
      %v155 = vld [vmem:[%s138 + $0x1c] sm:$0xf]
      %v156 = vld [vmem:[%s138 + $0x20] sm:$0xf]
      %v157 = vld [vmem:[%s138 + $0x24] sm:$0xf]
      %v158 = vld [vmem:[%s138 + $0x28] sm:$0xf]
      %v159 = vld [vmem:[%s138 + $0x2c] sm:$0xf]
      %v160 = vld [vmem:[%s138 + $0x30] sm:$0xf]
      %v161 = vld [vmem:[%s138 + $0x34] sm:$0xf]
      %v162 = vld [vmem:[%s138 + $0x38] sm:$0xf]
      %v163 = vld [vmem:[%s138 + $0x3c] sm:$0xf]
      %v164 = vld [vmem:[%s138 + $0x40] sm:$0xf]
      %v165 = vld [vmem:[%s138 + $0x44] sm:$0xf]
      %v166 = vld [vmem:[%s138 + $0x48] sm:$0xf]
      %v167 = vld [vmem:[%s138 + $0x4c] sm:$0xf]
      %v168 = vld [vmem:[%s138 + $0x50] sm:$0xf]
      %v169 = vld [vmem:[%s138 + $0x54] sm:$0xf]
      %v170 = vld [vmem:[%s138 + $0x58] sm:$0xf]
      %v171 = vld [vmem:[%s138 + $0x5c] sm:$0xf]
      %v172 = vld [vmem:[%s138 + $0x60] sm:$0xf]
      %v173 = vld [vmem:[%s138 + $0x64] sm:$0xf]
      %v174 = vld [vmem:[%s138 + $0x68] sm:$0xf]
      %v175 = vld [vmem:[%s138 + $0x6c] sm:$0xf]
      %v176 = vld [vmem:[%s138 + $0x70] sm:$0xf]
      %v177 = vld [vmem:[%s138 + $0x74] sm:$0xf]
      %v178 = vld [vmem:[%s138 + $0x78] sm:$0xf]
      %v179 = vld [vmem:[%s138 + $0x7c] sm:$0xf]
      %v184 = vunpack.c.l.b16 %v144
      %v185 = vunpack.c.h.b16 %v144
      %v186 = vunpack.c.l.b16 %v145
      %v187 = vunpack.c.h.b16 %v145
      %v188 = vunpack.c.l.b16 %v146
      %v189 = vunpack.c.h.b16 %v146
      %v190 = vunpack.c.l.b16 %v147
      %v191 = vunpack.c.h.b16 %v147
      %v192 = vpack.c.b16 %v186, %v184
      %v193 = vpack.c.b16 %v187, %v185
      %v194 = vpack.c.b16 %v190, %v188
      %v195 = vpack.c.b16 %v191, %v189
      %v232 = vunpack.c.l.b16 %v148
      %v233 = vunpack.c.l.b16 %v149
      %v234 = vunpack.c.l.b16 %v150
      %v235 = vunpack.c.l.b16 %v151
      %v236 = vunpack.c.l.b16 %v152
      %v237 = vunpack.c.l.b16 %v153
      %v238 = vunpack.c.l.b16 %v154
      %v239 = vunpack.c.l.b16 %v155
      %v240 = vunpack.c.l.b16 %v156
      %v241 = vunpack.c.l.b16 %v157
      %v242 = vunpack.c.l.b16 %v158
      %v243 = vunpack.c.l.b16 %v159
      %v244 = vunpack.c.l.b16 %v160
      %v245 = vunpack.c.l.b16 %v161
      %v246 = vunpack.c.l.b16 %v162
      %v247 = vunpack.c.l.b16 %v163
      %v248 = vunpack.c.l.b16 %v164
      %v249 = vunpack.c.l.b16 %v165
      %v250 = vunpack.c.l.b16 %v166
      %v251 = vunpack.c.l.b16 %v167
      %v252 = vunpack.c.l.b16 %v168
      %v253 = vunpack.c.l.b16 %v169
      %v254 = vunpack.c.l.b16 %v170
      %v255 = vunpack.c.l.b16 %v171
      %v256 = vunpack.c.l.b16 %v172
      %v257 = vunpack.c.l.b16 %v173
      %v258 = vunpack.c.l.b16 %v174
      %v259 = vunpack.c.l.b16 %v175
      %v260 = vunpack.c.l.b16 %v176
      %v261 = vunpack.c.l.b16 %v177
      %v262 = vunpack.c.l.b16 %v178
      %v263 = vunpack.c.l.b16 %v179
      %v264 = vpack.c.b16 %v233, %v232
      %v265 = vpack.c.b16 %v235, %v234
      %v266 = vpack.c.b16 %v237, %v236
      %v267 = vpack.c.b16 %v239, %v238
      %v268 = vpack.c.b16 %v241, %v240
      %v269 = vpack.c.b16 %v243, %v242
      %v270 = vpack.c.b16 %v245, %v244
      %v271 = vpack.c.b16 %v247, %v246
      %v272 = vpack.c.b16 %v249, %v248
      %v273 = vpack.c.b16 %v251, %v250
      %v274 = vpack.c.b16 %v253, %v252
      %v275 = vpack.c.b16 %v255, %v254
      %v276 = vpack.c.b16 %v257, %v256
      %v277 = vpack.c.b16 %v259, %v258
      %v278 = vpack.c.b16 %v261, %v260
      %v279 = vpack.c.b16 %v263, %v262
      %296 = vmatpush.bf16.msra.mxu0 %v271
      %297 = vmatpush.bf16.msra.mxu0 %v270
      %298 = vmatpush.bf16.msra.mxu0 %v269
      %299 = vmatpush.bf16.msra.mxu0 %v268
      %300 = vmatpush.bf16.msra.mxu0 %v267
      %301 = vmatpush.bf16.msra.mxu0 %v266
      %302 = vmatpush.bf16.msra.mxu0 %v265
      %303 = vmatpush.bf16.msra.mxu0 %v264
      %304 = vmatmul.bf16.gmra.mxu0 %v192
      %v305 = vpop.f32.mrf.mxu0
      %v306 = vadd.f32 0.0, %v305
      %v307 = vpop.f32.mrf.mxu0
      %v308 = vadd.f32 0.0, %v307
      %309 = vmatmul.bf16.gmra.mxu0 %v194
      %v310 = vpop.f32.mrf.mxu0
      %v311 = vadd.f32 0.0, %v310
      %v312 = vpop.f32.mrf.mxu0
      %v313 = vadd.f32 0.0, %v312
      %314 = vdwg.mxu0
      %315 = vmatpush.bf16.msra.mxu0 %v279
      %316 = vmatpush.bf16.msra.mxu0 %v278
      %317 = vmatpush.bf16.msra.mxu0 %v277
      %318 = vmatpush.bf16.msra.mxu0 %v276
      %319 = vmatpush.bf16.msra.mxu0 %v275
      %320 = vmatpush.bf16.msra.mxu0 %v274
      %321 = vmatpush.bf16.msra.mxu0 %v273
      %322 = vmatpush.bf16.msra.mxu0 %v272
      %323 = vmatmul.bf16.gmra.mxu0 %v193
      %v324 = vpop.f32.mrf.mxu0
      %v325 = vadd.f32 %v306, %v324
      %v326 = vpop.f32.mrf.mxu0
      %v327 = vadd.f32 %v308, %v326
      %328 = vmatmul.bf16.gmra.mxu0 %v195
      %v329 = vpop.f32.mrf.mxu0
      %v330 = vadd.f32 %v311, %v329
      %v331 = vpop.f32.mrf.mxu0
      %v332 = vadd.f32 %v313, %v331
      %333 = vdwg.mxu0
      %vm334 = vcmask 523264
      %v335 = vsel %vm334, %v325, 0.0
      %336 = vadd.xlane.f32.xlu0 %v335
      %v337 = vpop.xlane.xlu0 %336
      %v338 = vsel %vm334, %v327, 0.0
      %339 = vadd.xlane.f32.xlu0 %v338
      %v340 = vpop.xlane.xlu0 %339
      %v341 = vsel %vm334, %v330, 0.0
      %342 = vadd.xlane.f32.xlu0 %v341
      %v343 = vpop.xlane.xlu0 %342
      %v344 = vsel %vm334, %v332, 0.0
      %345 = vadd.xlane.f32.xlu0 %v344
      %v346 = vpop.xlane.xlu0 %345
      %v347 = vmul.f32 %v325, %v325
      %v348 = vmul.f32 %v327, %v327
      %v349 = vmul.f32 %v330, %v330
      %v350 = vmul.f32 %v332, %v332
      %v351 = vsel %vm334, %v347, 0.0
      %352 = vadd.xlane.f32.xlu0 %v351
      %v353 = vpop.xlane.xlu0 %352
      %v354 = vsel %vm334, %v348, 0.0
      %355 = vadd.xlane.f32.xlu0 %v354
      %v356 = vpop.xlane.xlu0 %355
      %v357 = vsel %vm334, %v349, 0.0
      %358 = vadd.xlane.f32.xlu0 %v357
      %v359 = vpop.xlane.xlu0 %358
      %v360 = vsel %vm334, %v350, 0.0
      %361 = vadd.xlane.f32.xlu0 %v360
      %v362 = vpop.xlane.xlu0 %361
      %v363 = vmul.f32 %v337, 0.015625
      %v364 = vmul.f32 %v340, 0.015625
      %v365 = vmul.f32 %v343, 0.015625
      %v366 = vmul.f32 %v346, 0.015625
      %v367 = vmul.f32 %v353, 0.015625
      %v368 = vmul.f32 %v356, 0.015625
      %v369 = vmul.f32 %v359, 0.015625
      %v370 = vmul.f32 %v362, 0.015625
      %v371 = vmul.f32 %v363, %v363
      %v372 = vmul.f32 %v364, %v364
      %v373 = vmul.f32 %v365, %v365
      %v374 = vmul.f32 %v366, %v366
      %v375 = vsub.f32 %v367, %v371
      %v376 = vsub.f32 %v368, %v372
      %v377 = vsub.f32 %v369, %v373
      %v378 = vsub.f32 %v370, %v374
      %v379 = vadd.f32 %v375, 1e-05
      %v380 = vadd.f32 %v376, 1e-05
      %v381 = vadd.f32 %v377, 1e-05
      %v382 = vadd.f32 %v378, 1e-05
      %v383 = vrsqrt.pop %v379
      %v384 = vmul.f32 %v383, %v379
      %v385 = vmul.f32 %v384, %v383
      %v386 = vmul.f32 0.5, %v385
      %v387 = vsub.f32 1.5, %v386
      %v388 = vmul.f32 %v383, %v387
      %vm389 = vweird.f32 %v379
      %vm390 = vweird.f32 %v383
      %vm391 = vmor %vm389, %vm390
      %v392 = vsel %vm391, %v383, %v388
      %v393 = vrsqrt.pop %v380
      %v394 = vmul.f32 %v393, %v380
      %v395 = vmul.f32 %v394, %v393
      %v396 = vmul.f32 0.5, %v395
      %v397 = vsub.f32 1.5, %v396
      %v398 = vmul.f32 %v393, %v397
      %vm399 = vweird.f32 %v380
      %vm400 = vweird.f32 %v393
      %vm401 = vmor %vm399, %vm400
      %v402 = vsel %vm401, %v393, %v398
      %v403 = vrsqrt.pop %v381
      %v404 = vmul.f32 %v403, %v381
      %v405 = vmul.f32 %v404, %v403
      %v406 = vmul.f32 0.5, %v405
      %v407 = vsub.f32 1.5, %v406
      %v408 = vmul.f32 %v403, %v407
      %vm409 = vweird.f32 %v381
      %vm410 = vweird.f32 %v403
      %vm411 = vmor %vm409, %vm410
      %v412 = vsel %vm411, %v403, %v408
      %v413 = vrsqrt.pop %v382
      %v414 = vmul.f32 %v413, %v382
      %v415 = vmul.f32 %v414, %v413
      %v416 = vmul.f32 0.5, %v415
      %v417 = vsub.f32 1.5, %v416
      %v418 = vmul.f32 %v413, %v417
      %vm419 = vweird.f32 %v382
      %vm420 = vweird.f32 %v413
      %vm421 = vmor %vm419, %vm420
      %v422 = vsel %vm421, %v413, %v418
      %v423 = vsub.f32 %v325, %v363
      %v424 = vsub.f32 %v327, %v364
      %v425 = vsub.f32 %v330, %v365
      %v426 = vsub.f32 %v332, %v366
      %v427 = vmul.f32 %v423, %v392
      %v428 = vmul.f32 %v424, %v402
      %v429 = vmul.f32 %v425, %v412
      %v430 = vmul.f32 %v426, %v422
      %v431 = vmax.f32 %v427, 0.0
      %v432 = vmax.f32 %v428, 0.0
      %v433 = vmax.f32 %v429, 0.0
      %v434 = vmax.f32 %v430, 0.0
      %435 = vst.msk [vmem:[%s143] sm:$0xff] %vm334, %v431
      %436 = vst.msk [vmem:[%s143 + $0x8] sm:$0xff] %vm334, %v432
      %437 = vst.msk [vmem:[%s143 + $0x10] sm:$0xff] %vm334, %v433
      %438 = vst.msk [vmem:[%s143 + $0x18] sm:$0xff] %vm334, %v434
      %p439 = scmp.lt.s32.totalorder %s13, 1
      %s440 = scalar_select %p439, %s13, 1
      %s441 = smul.addr %s440, 4
      %s442 = smul.addr %s441, 8
      %s443 = scalar_lea.vmem %s2, %s442
      // Predicated region
      $region29: #{discriminator_forward.6} parent=27 // pred_check
        %p444 = pneg %p78
      $region30: #{discriminator_forward.6} parent=27 // pred_check_branch
        %446 = sbr.rel (%p444) target = $region32
      $region31: #{discriminator_forward.6} parent=27 // pred_region
        _
      $region32: #{discriminator_forward.6} parent=27 // pred_fallthru
        _
    $region28: #{discriminator_forward.6} parent=5 // pred_fallthru
      _
    %p447 = scmp.le.s32.totalorder 2, %s8
    // Predicated region
    $region33: #{discriminator_forward.6} parent=5 // pred_check
      %p448 = pneg %p447
    $region34: #{discriminator_forward.6} parent=5 // pred_check_branch
      %450 = sbr.rel (%p448) target = $region36
    $region35: #{discriminator_forward.6} parent=5 // pred_region
      %s451 = ssub.s32 %s8, 2
      // Predicated region
      $region37: #{discriminator_forward.6} parent=35 // pred_check
        %p452 = pneg %p84
      $region38: #{discriminator_forward.6} parent=35 // pred_check_branch
        %454 = sbr.rel (%p452) target = $region40
      $region39: #{discriminator_forward.6} parent=35 // pred_region
        %p455 = scmp.lt.s32.totalorder %s14, 1
        %s456 = scalar_select %p455, %s14, 1
        %s457 = smul.addr %s456, 4
        %s458 = smul.addr %s457, 8
        %s459 = scalar_lea.vmem %s2, %s458
      $region40: #{discriminator_forward.6} parent=35 // pred_fallthru
        _
    $region36: #{discriminator_forward.6} parent=5 // pred_fallthru
      _
  $region6: #{discriminator_forward.6} parent=0 // loop_footer
    %s12 = sadd.s32 1, %s8
  $region7: #{discriminator_forward.6} parent=0 // loop_footer_branch
    %7 = sbr.rel target = $region3
  $region8: #{discriminator_forward.6} parent=0 // loop_exit
    _

// kernel: discriminator_forward.7
$region0: #{discriminator_forward.7}
  #allocation0 [shape = 'u32[]', space=smem, size = 0x4, offset = 0x4, fixed_abs, tag = 'smem constant byte address 0x4 - core index']
  #allocation1 [shape = 'u32[72,128]{1,0:T(1,128)}', space=vmem, size = 0x9000, scoped, tag = 'internal scratch']
  %s0 = inlined_call_operand.vmem [shape: bf16[2,512,16], index: 0, kind: input, shape index: {}]
  %s1 = inlined_call_operand.vmem [shape: bf16[64,512], index: 1, kind: input, shape index: {}]
  %s2 = inlined_call_operand.vmem [shape: f32[2,64,16], index: 2, kind: output, shape index: {}]
  %s3 = sld [smem:[#allocation0]]
  $region41: #{discriminator_forward.7} parent=0
    _
  %s5 = ssub.s32 1, %s3
  %s6 = scalar_select 0, %s5, %s3
  loop: start=0, step=1, limit=4
  $region2: #{discriminator_forward.7} parent=0 // loop_pre_header
    _
  $region3: #{discriminator_forward.7} parent=0 // loop_header
    %s8 = sphi 0, %s12
    %p9 = scmp.ge.s32.totalorder %s8, 4
    %s18 = sphi 0, %s20
    %s21 = sphi 0, %s18
    %s22 = sphi 0, %s21
    %s38 = sphi 0, %s22
    %s42 = sphi 0, %s42
    %s44 = sphi 0, %s42
    %s45 = sphi 0, %s44
    %s59 = sphi 0, %s45
    %s65 = sphi 0, %s67
    %s68 = sphi 0, %s65
    %s69 = sphi 0, %s68
    %s85 = sphi 0, %s69
  $region4: #{discriminator_forward.7} parent=0 // loop_header_branch
    %11 = sbr.rel (%p9) target = $region8
  $region5: #{discriminator_forward.7} parent=0 // loop_body
    %s13 = ssub.s32 %s8, 1
    %s14 = ssub.s32 %s8, 2
    %s15 = sadd.s32 %s8, 1
    %s16 = ssub.s32 %s8, %s15
    %p17 = scmp.eq.s32.totalorder %s16, 0
    %s19 = sadd.s32 %s18, 1
    %s20 = scalar_select %p17, %s18, %s19
    %p23 = pneg %p17
    %p24 = scmp.eq.s32.totalorder %s8, 1
    %p25 = por %p23, %p24
    %p26 = scmp.ne.s32.totalorder %s18, %s21
    %p27 = scmp.eq.s32.totalorder %s8, 0
    %p28 = por %p26, %p27
    %p29 = scmp.ne.s32.totalorder %s18, %s21
    %p30 = scmp.eq.s32.totalorder %s13, 1
    %p31 = por %p29, %p30
    %p32 = scmp.ne.s32.totalorder %s21, %s22
    %p33 = scmp.eq.s32.totalorder %s13, 0
    %p34 = por %p32, %p33
    %p35 = scmp.ne.s32.totalorder %s21, %s22
    %p36 = scmp.eq.s32.totalorder %s14, 1
    %p37 = por %p35, %p36
    %p39 = scmp.ne.s32.totalorder %s22, %s38
    %p40 = scmp.eq.s32.totalorder %s14, 0
    %p41 = por %p39, %p40
    %s43 = sadd.s32 %s42, 1
    %p46 = scmp.eq.s32.totalorder %s8, 1
    %p47 = scmp.ne.s32.totalorder %s42, %s44
    %p48 = scmp.eq.s32.totalorder %s8, 0
    %p49 = por %p47, %p48
    %p50 = scmp.ne.s32.totalorder %s42, %s44
    %p51 = scmp.eq.s32.totalorder %s13, 1
    %p52 = por %p50, %p51
    %p53 = scmp.ne.s32.totalorder %s44, %s45
    %p54 = scmp.eq.s32.totalorder %s13, 0
    %p55 = por %p53, %p54
    %p56 = scmp.ne.s32.totalorder %s44, %s45
    %p57 = scmp.eq.s32.totalorder %s14, 1
    %p58 = por %p56, %p57
    %p60 = scmp.ne.s32.totalorder %s45, %s59
    %p61 = scmp.eq.s32.totalorder %s14, 0
    %p62 = por %p60, %p61
    %s63 = ssub.s32 %s8, %s15
    %p64 = scmp.eq.s32.totalorder %s63, 0
    %s66 = sadd.s32 %s65, 1
    %s67 = scalar_select %p64, %s65, %s66
    %p70 = pneg %p64
    %p71 = scmp.eq.s32.totalorder %s8, 1
    %p72 = por %p70, %p71
    %p73 = scmp.ne.s32.totalorder %s65, %s68
    %p74 = scmp.eq.s32.totalorder %s8, 0
    %p75 = por %p73, %p74
    %p76 = scmp.ne.s32.totalorder %s65, %s68
    %p77 = scmp.eq.s32.totalorder %s13, 1
    %p78 = por %p76, %p77
    %p79 = scmp.ne.s32.totalorder %s68, %s69
    %p80 = scmp.eq.s32.totalorder %s13, 0
    %p81 = por %p79, %p80
    %p82 = scmp.ne.s32.totalorder %s68, %s69
    %p83 = scmp.eq.s32.totalorder %s14, 1
    %p84 = por %p82, %p83
    %p86 = scmp.ne.s32.totalorder %s69, %s85
    %p87 = scmp.eq.s32.totalorder %s14, 0
    %p88 = por %p86, %p87
    %p89 = scmp.le.s32.totalorder 1, %s8
    %p90 = scmp.lt.s32.totalorder %s8, 3
    %p91 = pnand %p89, %p90
    %p92 = pneg %p91
    // Predicated region
    $region9: #{discriminator_forward.7} parent=5 // pred_check
      _
    $region10: #{discriminator_forward.7} parent=5 // pred_check_branch
      %94 = sbr.rel (%p91) target = $region12
    $region11: #{discriminator_forward.7} parent=5 // pred_region
      %s95 = ssub.s32 %s8, 1
      // Predicated region
      $region13: #{discriminator_forward.7} parent=11 // pred_check
        %p96 = pneg %p55
      $region14: #{discriminator_forward.7} parent=11 // pred_check_branch
        %98 = sbr.rel (%p96) target = $region16
      $region15: #{discriminator_forward.7} parent=11 // pred_region
        _
      $region16: #{discriminator_forward.7} parent=11 // pred_fallthru
        _
    $region12: #{discriminator_forward.7} parent=5 // pred_fallthru
      _
    %p99 = scmp.lt.s32.totalorder %s8, 2
    // Predicated region
    $region17: #{discriminator_forward.7} parent=5 // pred_check
      %p100 = pneg %p99
    $region18: #{discriminator_forward.7} parent=5 // pred_check_branch
      %102 = sbr.rel (%p100) target = $region20
    $region19: #{discriminator_forward.7} parent=5 // pred_region
      // Predicated region
      $region21: #{discriminator_forward.7} parent=19 // pred_check
        %p103 = pneg %p28
      $region22: #{discriminator_forward.7} parent=19 // pred_check_branch
        %105 = sbr.rel (%p103) target = $region24
      $region23: #{discriminator_forward.7} parent=19 // pred_region
        %p106 = scmp.lt.s32.totalorder %s8, 1
        %s107 = scalar_select %p106, %s8, 1
        %s108 = smul.addr %s107, 64
        %s109 = smul.addr %s108, 4
        %s110 = scalar_lea.vmem %s0, %s109
      $region24: #{discriminator_forward.7} parent=19 // pred_fallthru
        _
    $region20: #{discriminator_forward.7} parent=5 // pred_fallthru
      _
    %p111 = scmp.le.s32.totalorder 1, %s8
    %p112 = scmp.lt.s32.totalorder %s8, 3
    %p113 = pnand %p111, %p112
    %p114 = pneg %p113
    // Predicated region
    $region25: #{discriminator_forward.7} parent=5 // pred_check
      _
    $region26: #{discriminator_forward.7} parent=5 // pred_check_branch
      %116 = sbr.rel (%p113) target = $region28
    $region27: #{discriminator_forward.7} parent=5 // pred_region
      %s117 = ssub.s32 %s8, 1
      %p118 = scmp.lt.s32.totalorder %s13, 1
      %s119 = scalar_select %p118, %s13, 1
      %s120 = smul.addr %s119, 64
      %s121 = smul.addr %s120, 4
      %s122 = scalar_lea.vmem %s0, %s121
      %p123 = pneg %p34
      %p124 = pneg %p31
      %p125 = pneg %p55
      %p126 = pneg %p52
      %p127 = pneg %p81
      %p128 = pneg %p78
      %p129 = scmp.lt.s32.totalorder %s13, 1
      %s130 = scalar_select %p129, %s13, 1
      %s131 = smul.addr %s130, 8
      %s132 = smul.addr %s131, 8
      %s133 = scalar_lea.vmem %s2, %s132
      %p134 = scmp.lt.s32.totalorder %s13, 1
      %s135 = scalar_select %p134, %s13, 1
      %s136 = smul.addr %s135, 64
      %s137 = smul.addr %s136, 4
      %s138 = scalar_lea.vmem %s0, %s137
      %p139 = scmp.lt.s32.totalorder %s13, 1
      %s140 = scalar_select %p139, %s13, 1
      %s141 = smul.addr %s140, 8
      %s142 = smul.addr %s141, 8
      %s143 = scalar_lea.vmem %s2, %s142
      %v144 = vld [vmem:[%s1] sm:$0xff]
      %v145 = vld [vmem:[%s1 + $0x8] sm:$0xff]
      %v146 = vld [vmem:[%s1 + $0x10] sm:$0xff]
      %v147 = vld [vmem:[%s1 + $0x18] sm:$0xff]
      %v148 = vld [vmem:[%s1 + $0x20] sm:$0xff]
      %v149 = vld [vmem:[%s1 + $0x28] sm:$0xff]
      %v150 = vld [vmem:[%s1 + $0x30] sm:$0xff]
      %v151 = vld [vmem:[%s1 + $0x38] sm:$0xff]
      %v152 = vld [vmem:[%s1 + $0x40] sm:$0xff]
      %v153 = vld [vmem:[%s1 + $0x48] sm:$0xff]
      %v154 = vld [vmem:[%s1 + $0x50] sm:$0xff]
      %v155 = vld [vmem:[%s1 + $0x58] sm:$0xff]
      %v156 = vld [vmem:[%s1 + $0x60] sm:$0xff]
      %v157 = vld [vmem:[%s1 + $0x68] sm:$0xff]
      %v158 = vld [vmem:[%s1 + $0x70] sm:$0xff]
      %v159 = vld [vmem:[%s1 + $0x78] sm:$0xff]
      %v160 = vld [vmem:[%s138] sm:$0xf]
      %v161 = vld [vmem:[%s138 + $0x4] sm:$0xf]
      %v162 = vld [vmem:[%s138 + $0x8] sm:$0xf]
      %v163 = vld [vmem:[%s138 + $0xc] sm:$0xf]
      %v164 = vld [vmem:[%s138 + $0x10] sm:$0xf]
      %v165 = vld [vmem:[%s138 + $0x14] sm:$0xf]
      %v166 = vld [vmem:[%s138 + $0x18] sm:$0xf]
      %v167 = vld [vmem:[%s138 + $0x1c] sm:$0xf]
      %v168 = vld [vmem:[%s138 + $0x20] sm:$0xf]
      %v169 = vld [vmem:[%s138 + $0x24] sm:$0xf]
      %v170 = vld [vmem:[%s138 + $0x28] sm:$0xf]
      %v171 = vld [vmem:[%s138 + $0x2c] sm:$0xf]
      %v172 = vld [vmem:[%s138 + $0x30] sm:$0xf]
      %v173 = vld [vmem:[%s138 + $0x34] sm:$0xf]
      %v174 = vld [vmem:[%s138 + $0x38] sm:$0xf]
      %v175 = vld [vmem:[%s138 + $0x3c] sm:$0xf]
      %v176 = vld [vmem:[%s138 + $0x40] sm:$0xf]
      %v177 = vld [vmem:[%s138 + $0x44] sm:$0xf]
      %v178 = vld [vmem:[%s138 + $0x48] sm:$0xf]
      %v179 = vld [vmem:[%s138 + $0x4c] sm:$0xf]
      %v180 = vld [vmem:[%s138 + $0x50] sm:$0xf]
      %v181 = vld [vmem:[%s138 + $0x54] sm:$0xf]
      %v182 = vld [vmem:[%s138 + $0x58] sm:$0xf]
      %v183 = vld [vmem:[%s138 + $0x5c] sm:$0xf]
      %v184 = vld [vmem:[%s138 + $0x60] sm:$0xf]
      %v185 = vld [vmem:[%s138 + $0x64] sm:$0xf]
      %v186 = vld [vmem:[%s138 + $0x68] sm:$0xf]
      %v187 = vld [vmem:[%s138 + $0x6c] sm:$0xf]
      %v188 = vld [vmem:[%s138 + $0x70] sm:$0xf]
      %v189 = vld [vmem:[%s138 + $0x74] sm:$0xf]
      %v190 = vld [vmem:[%s138 + $0x78] sm:$0xf]
      %v191 = vld [vmem:[%s138 + $0x7c] sm:$0xf]
      %v192 = vld [vmem:[%s138 + $0x80] sm:$0xf]
      %v193 = vld [vmem:[%s138 + $0x84] sm:$0xf]
      %v194 = vld [vmem:[%s138 + $0x88] sm:$0xf]
      %v195 = vld [vmem:[%s138 + $0x8c] sm:$0xf]
      %v196 = vld [vmem:[%s138 + $0x90] sm:$0xf]
      %v197 = vld [vmem:[%s138 + $0x94] sm:$0xf]
      %v198 = vld [vmem:[%s138 + $0x98] sm:$0xf]
      %v199 = vld [vmem:[%s138 + $0x9c] sm:$0xf]
      %v200 = vld [vmem:[%s138 + $0xa0] sm:$0xf]
      %v201 = vld [vmem:[%s138 + $0xa4] sm:$0xf]
      %v202 = vld [vmem:[%s138 + $0xa8] sm:$0xf]
      %v203 = vld [vmem:[%s138 + $0xac] sm:$0xf]
      %v204 = vld [vmem:[%s138 + $0xb0] sm:$0xf]
      %v205 = vld [vmem:[%s138 + $0xb4] sm:$0xf]
      %v206 = vld [vmem:[%s138 + $0xb8] sm:$0xf]
      %v207 = vld [vmem:[%s138 + $0xbc] sm:$0xf]
      %v208 = vld [vmem:[%s138 + $0xc0] sm:$0xf]
      %v209 = vld [vmem:[%s138 + $0xc4] sm:$0xf]
      %v210 = vld [vmem:[%s138 + $0xc8] sm:$0xf]
      %v211 = vld [vmem:[%s138 + $0xcc] sm:$0xf]
      %v212 = vld [vmem:[%s138 + $0xd0] sm:$0xf]
      %v213 = vld [vmem:[%s138 + $0xd4] sm:$0xf]
      %v214 = vld [vmem:[%s138 + $0xd8] sm:$0xf]
      %v215 = vld [vmem:[%s138 + $0xdc] sm:$0xf]
      %v216 = vld [vmem:[%s138 + $0xe0] sm:$0xf]
      %v217 = vld [vmem:[%s138 + $0xe4] sm:$0xf]
      %v218 = vld [vmem:[%s138 + $0xe8] sm:$0xf]
      %v219 = vld [vmem:[%s138 + $0xec] sm:$0xf]
      %v220 = vld [vmem:[%s138 + $0xf0] sm:$0xf]
      %v221 = vld [vmem:[%s138 + $0xf4] sm:$0xf]
      %v222 = vld [vmem:[%s138 + $0xf8] sm:$0xf]
      %v223 = vld [vmem:[%s138 + $0xfc] sm:$0xf]
      %v240 = vunpack.c.l.b16 %v144
      %v241 = vunpack.c.h.b16 %v144
      %v242 = vunpack.c.l.b16 %v145
      %v243 = vunpack.c.h.b16 %v145
      %v244 = vunpack.c.l.b16 %v146
      %v245 = vunpack.c.h.b16 %v146
      %v246 = vunpack.c.l.b16 %v147
      %v247 = vunpack.c.h.b16 %v147
      %v248 = vunpack.c.l.b16 %v148
      %v249 = vunpack.c.h.b16 %v148
      %v250 = vunpack.c.l.b16 %v149
      %v251 = vunpack.c.h.b16 %v149
      %v252 = vunpack.c.l.b16 %v150
      %v253 = vunpack.c.h.b16 %v150
      %v254 = vunpack.c.l.b16 %v151
      %v255 = vunpack.c.h.b16 %v151
      %v256 = vunpack.c.l.b16 %v152
      %v257 = vunpack.c.h.b16 %v152
      %v258 = vunpack.c.l.b16 %v153
      %v259 = vunpack.c.h.b16 %v153
      %v260 = vunpack.c.l.b16 %v154
      %v261 = vunpack.c.h.b16 %v154
      %v262 = vunpack.c.l.b16 %v155
      %v263 = vunpack.c.h.b16 %v155
      %v264 = vunpack.c.l.b16 %v156
      %v265 = vunpack.c.h.b16 %v156
      %v266 = vunpack.c.l.b16 %v157
      %v267 = vunpack.c.h.b16 %v157
      %v268 = vunpack.c.l.b16 %v158
      %v269 = vunpack.c.h.b16 %v158
      %v270 = vunpack.c.l.b16 %v159
      %v271 = vunpack.c.h.b16 %v159
      %v272 = vpack.c.b16 %v244, %v240
      %v273 = vpack.c.b16 %v245, %v241
      %v274 = vpack.c.b16 %v246, %v242
      %v275 = vpack.c.b16 %v247, %v243
      %v276 = vpack.c.b16 %v252, %v248
      %v277 = vpack.c.b16 %v253, %v249
      %v278 = vpack.c.b16 %v254, %v250
      %v279 = vpack.c.b16 %v255, %v251
      %v280 = vpack.c.b16 %v260, %v256
      %v281 = vpack.c.b16 %v261, %v257
      %v282 = vpack.c.b16 %v262, %v258
      %v283 = vpack.c.b16 %v263, %v259
      %v284 = vpack.c.b16 %v268, %v264
      %v285 = vpack.c.b16 %v269, %v265
      %v286 = vpack.c.b16 %v270, %v266
      %v287 = vpack.c.b16 %v271, %v267
      %v368 = vunpack.c.l.b16 %v160
      %v369 = vunpack.c.l.b16 %v161
      %v370 = vunpack.c.l.b16 %v162
      %v371 = vunpack.c.l.b16 %v163
      %v372 = vunpack.c.l.b16 %v164
      %v373 = vunpack.c.l.b16 %v165
      %v374 = vunpack.c.l.b16 %v166
      %v375 = vunpack.c.l.b16 %v167
      %v376 = vunpack.c.l.b16 %v168
      %v377 = vunpack.c.l.b16 %v169
      %v378 = vunpack.c.l.b16 %v170
      %v379 = vunpack.c.l.b16 %v171
      %v380 = vunpack.c.l.b16 %v172
      %v381 = vunpack.c.l.b16 %v173
      %v382 = vunpack.c.l.b16 %v174
      %v383 = vunpack.c.l.b16 %v175
      %v384 = vunpack.c.l.b16 %v176
      %v385 = vunpack.c.l.b16 %v177
      %v386 = vunpack.c.l.b16 %v178
      %v387 = vunpack.c.l.b16 %v179
      %v388 = vunpack.c.l.b16 %v180
      %v389 = vunpack.c.l.b16 %v181
      %v390 = vunpack.c.l.b16 %v182
      %v391 = vunpack.c.l.b16 %v183
      %v392 = vunpack.c.l.b16 %v184
      %v393 = vunpack.c.l.b16 %v185
      %v394 = vunpack.c.l.b16 %v186
      %v395 = vunpack.c.l.b16 %v187
      %v396 = vunpack.c.l.b16 %v188
      %v397 = vunpack.c.l.b16 %v189
      %v398 = vunpack.c.l.b16 %v190
      %v399 = vunpack.c.l.b16 %v191
      %v400 = vunpack.c.l.b16 %v192
      %v401 = vunpack.c.l.b16 %v193
      %v402 = vunpack.c.l.b16 %v194
      %v403 = vunpack.c.l.b16 %v195
      %v404 = vunpack.c.l.b16 %v196
      %v405 = vunpack.c.l.b16 %v197
      %v406 = vunpack.c.l.b16 %v198
      %v407 = vunpack.c.l.b16 %v199
      %v408 = vunpack.c.l.b16 %v200
      %v409 = vunpack.c.l.b16 %v201
      %v410 = vunpack.c.l.b16 %v202
      %v411 = vunpack.c.l.b16 %v203
      %v412 = vunpack.c.l.b16 %v204
      %v413 = vunpack.c.l.b16 %v205
      %v414 = vunpack.c.l.b16 %v206
      %v415 = vunpack.c.l.b16 %v207
      %v416 = vunpack.c.l.b16 %v208
      %v417 = vunpack.c.l.b16 %v209
      %v418 = vunpack.c.l.b16 %v210
      %v419 = vunpack.c.l.b16 %v211
      %v420 = vunpack.c.l.b16 %v212
      %v421 = vunpack.c.l.b16 %v213
      %v422 = vunpack.c.l.b16 %v214
      %v423 = vunpack.c.l.b16 %v215
      %v424 = vunpack.c.l.b16 %v216
      %v425 = vunpack.c.l.b16 %v217
      %v426 = vunpack.c.l.b16 %v218
      %v427 = vunpack.c.l.b16 %v219
      %v428 = vunpack.c.l.b16 %v220
      %v429 = vunpack.c.l.b16 %v221
      %v430 = vunpack.c.l.b16 %v222
      %v431 = vunpack.c.l.b16 %v223
      %v432 = vpack.c.b16 %v369, %v368
      %v433 = vpack.c.b16 %v371, %v370
      %v434 = vpack.c.b16 %v373, %v372
      %v435 = vpack.c.b16 %v375, %v374
      %v436 = vpack.c.b16 %v377, %v376
      %v437 = vpack.c.b16 %v379, %v378
      %v438 = vpack.c.b16 %v381, %v380
      %v439 = vpack.c.b16 %v383, %v382
      %v440 = vpack.c.b16 %v385, %v384
      %v441 = vpack.c.b16 %v387, %v386
      %v442 = vpack.c.b16 %v389, %v388
      %v443 = vpack.c.b16 %v391, %v390
      %v444 = vpack.c.b16 %v393, %v392
      %v445 = vpack.c.b16 %v395, %v394
      %v446 = vpack.c.b16 %v397, %v396
      %v447 = vpack.c.b16 %v399, %v398
      %v448 = vpack.c.b16 %v401, %v400
      %v449 = vpack.c.b16 %v403, %v402
      %v450 = vpack.c.b16 %v405, %v404
      %v451 = vpack.c.b16 %v407, %v406
      %v452 = vpack.c.b16 %v409, %v408
      %v453 = vpack.c.b16 %v411, %v410
      %v454 = vpack.c.b16 %v413, %v412
      %v455 = vpack.c.b16 %v415, %v414
      %v456 = vpack.c.b16 %v417, %v416
      %v457 = vpack.c.b16 %v419, %v418
      %v458 = vpack.c.b16 %v421, %v420
      %v459 = vpack.c.b16 %v423, %v422
      %v460 = vpack.c.b16 %v425, %v424
      %v461 = vpack.c.b16 %v427, %v426
      %v462 = vpack.c.b16 %v429, %v428
      %v463 = vpack.c.b16 %v431, %v430
      %496 = vmatpush.bf16.msra.mxu0 %v439
      %497 = vmatpush.bf16.msra.mxu0 %v438
      %498 = vmatpush.bf16.msra.mxu0 %v437
      %499 = vmatpush.bf16.msra.mxu0 %v436
      %500 = vmatpush.bf16.msra.mxu0 %v435
      %501 = vmatpush.bf16.msra.mxu0 %v434
      %502 = vmatpush.bf16.msra.mxu0 %v433
      %503 = vmatpush.bf16.msra.mxu0 %v432
      %504 = vmatmul.bf16.gmra.mxu0 %v272
      %v505 = vpop.f32.mrf.mxu0
      %v506 = vadd.f32 0.0, %v505
      %v507 = vpop.f32.mrf.mxu0
      %v508 = vadd.f32 0.0, %v507
      %509 = vmatmul.bf16.gmra.mxu0 %v276
      %v510 = vpop.f32.mrf.mxu0
      %v511 = vadd.f32 0.0, %v510
      %v512 = vpop.f32.mrf.mxu0
      %v513 = vadd.f32 0.0, %v512
      %514 = vmatmul.bf16.gmra.mxu0 %v280
      %v515 = vpop.f32.mrf.mxu0
      %v516 = vadd.f32 0.0, %v515
      %v517 = vpop.f32.mrf.mxu0
      %v518 = vadd.f32 0.0, %v517
      %519 = vmatmul.bf16.gmra.mxu0 %v284
      %v520 = vpop.f32.mrf.mxu0
      %v521 = vadd.f32 0.0, %v520
      %v522 = vpop.f32.mrf.mxu0
      %v523 = vadd.f32 0.0, %v522
      %524 = vdwg.mxu0
      %525 = vmatpush.bf16.msra.mxu0 %v447
      %526 = vmatpush.bf16.msra.mxu0 %v446
      %527 = vmatpush.bf16.msra.mxu0 %v445
      %528 = vmatpush.bf16.msra.mxu0 %v444
      %529 = vmatpush.bf16.msra.mxu0 %v443
      %530 = vmatpush.bf16.msra.mxu0 %v442
      %531 = vmatpush.bf16.msra.mxu0 %v441
      %532 = vmatpush.bf16.msra.mxu0 %v440
      %533 = vmatmul.bf16.gmra.mxu0 %v273
      %v534 = vpop.f32.mrf.mxu0
      %v535 = vadd.f32 %v506, %v534
      %v536 = vpop.f32.mrf.mxu0
      %v537 = vadd.f32 %v508, %v536
      %538 = vmatmul.bf16.gmra.mxu0 %v277
      %v539 = vpop.f32.mrf.mxu0
      %v540 = vadd.f32 %v511, %v539
      %v541 = vpop.f32.mrf.mxu0
      %v542 = vadd.f32 %v513, %v541
      %543 = vmatmul.bf16.gmra.mxu0 %v281
      %v544 = vpop.f32.mrf.mxu0
      %v545 = vadd.f32 %v516, %v544
      %v546 = vpop.f32.mrf.mxu0
      %v547 = vadd.f32 %v518, %v546
      %548 = vmatmul.bf16.gmra.mxu0 %v285
      %v549 = vpop.f32.mrf.mxu0
      %v550 = vadd.f32 %v521, %v549
      %v551 = vpop.f32.mrf.mxu0
      %v552 = vadd.f32 %v523, %v551
      %553 = vdwg.mxu0
      %554 = vmatpush.bf16.msra.mxu0 %v455
      %555 = vmatpush.bf16.msra.mxu0 %v454
      %556 = vmatpush.bf16.msra.mxu0 %v453
      %557 = vmatpush.bf16.msra.mxu0 %v452
      %558 = vmatpush.bf16.msra.mxu0 %v451
      %559 = vmatpush.bf16.msra.mxu0 %v450
      %560 = vmatpush.bf16.msra.mxu0 %v449
      %561 = vmatpush.bf16.msra.mxu0 %v448
      %562 = vmatmul.bf16.gmra.mxu0 %v274
      %v563 = vpop.f32.mrf.mxu0
      %v564 = vadd.f32 %v535, %v563
      %v565 = vpop.f32.mrf.mxu0
      %v566 = vadd.f32 %v537, %v565
      %567 = vmatmul.bf16.gmra.mxu0 %v278
      %v568 = vpop.f32.mrf.mxu0
      %v569 = vadd.f32 %v540, %v568
      %v570 = vpop.f32.mrf.mxu0
      %v571 = vadd.f32 %v542, %v570
      %572 = vmatmul.bf16.gmra.mxu0 %v282
      %v573 = vpop.f32.mrf.mxu0
      %v574 = vadd.f32 %v545, %v573
      %v575 = vpop.f32.mrf.mxu0
      %v576 = vadd.f32 %v547, %v575
      %577 = vmatmul.bf16.gmra.mxu0 %v286
      %v578 = vpop.f32.mrf.mxu0
      %v579 = vadd.f32 %v550, %v578
      %v580 = vpop.f32.mrf.mxu0
      %v581 = vadd.f32 %v552, %v580
      %582 = vdwg.mxu0
      %583 = vmatpush.bf16.msra.mxu0 %v463
      %584 = vmatpush.bf16.msra.mxu0 %v462
      %585 = vmatpush.bf16.msra.mxu0 %v461
      %586 = vmatpush.bf16.msra.mxu0 %v460
      %587 = vmatpush.bf16.msra.mxu0 %v459
      %588 = vmatpush.bf16.msra.mxu0 %v458
      %589 = vmatpush.bf16.msra.mxu0 %v457
      %590 = vmatpush.bf16.msra.mxu0 %v456
      %591 = vmatmul.bf16.gmra.mxu0 %v275
      %v592 = vpop.f32.mrf.mxu0
      %v593 = vadd.f32 %v564, %v592
      %v594 = vpop.f32.mrf.mxu0
      %v595 = vadd.f32 %v566, %v594
      %596 = vmatmul.bf16.gmra.mxu0 %v279
      %v597 = vpop.f32.mrf.mxu0
      %v598 = vadd.f32 %v569, %v597
      %v599 = vpop.f32.mrf.mxu0
      %v600 = vadd.f32 %v571, %v599
      %601 = vmatmul.bf16.gmra.mxu0 %v283
      %v602 = vpop.f32.mrf.mxu0
      %v603 = vadd.f32 %v574, %v602
      %v604 = vpop.f32.mrf.mxu0
      %v605 = vadd.f32 %v576, %v604
      %606 = vmatmul.bf16.gmra.mxu0 %v287
      %v607 = vpop.f32.mrf.mxu0
      %v608 = vadd.f32 %v579, %v607
      %v609 = vpop.f32.mrf.mxu0
      %v610 = vadd.f32 %v581, %v609
      %611 = vdwg.mxu0
      %vm612 = vcmask 130048
      %v613 = vsel %vm612, %v593, 0.0
      %614 = vadd.xlane.f32.xlu0 %v613
      %v615 = vpop.xlane.xlu0 %614
      %v616 = vsel %vm612, %v595, 0.0
      %617 = vadd.xlane.f32.xlu0 %v616
      %v618 = vpop.xlane.xlu0 %617
      %v619 = vsel %vm612, %v598, 0.0
      %620 = vadd.xlane.f32.xlu0 %v619
      %v621 = vpop.xlane.xlu0 %620
      %v622 = vsel %vm612, %v600, 0.0
      %623 = vadd.xlane.f32.xlu0 %v622
      %v624 = vpop.xlane.xlu0 %623
      %v625 = vsel %vm612, %v603, 0.0
      %626 = vadd.xlane.f32.xlu0 %v625
      %v627 = vpop.xlane.xlu0 %626
      %v628 = vsel %vm612, %v605, 0.0
      %629 = vadd.xlane.f32.xlu0 %v628
      %v630 = vpop.xlane.xlu0 %629
      %v631 = vsel %vm612, %v608, 0.0
      %632 = vadd.xlane.f32.xlu0 %v631
      %v633 = vpop.xlane.xlu0 %632
      %v634 = vsel %vm612, %v610, 0.0
      %635 = vadd.xlane.f32.xlu0 %v634
      %v636 = vpop.xlane.xlu0 %635
      %v637 = vmul.f32 %v593, %v593
      %v638 = vmul.f32 %v595, %v595
      %v639 = vmul.f32 %v598, %v598
      %v640 = vmul.f32 %v600, %v600
      %v641 = vmul.f32 %v603, %v603
      %v642 = vmul.f32 %v605, %v605
      %v643 = vmul.f32 %v608, %v608
      %v644 = vmul.f32 %v610, %v610
      %v645 = vsel %vm612, %v637, 0.0
      %646 = vadd.xlane.f32.xlu0 %v645
      %v647 = vpop.xlane.xlu0 %646
      %v648 = vsel %vm612, %v638, 0.0
      %649 = vadd.xlane.f32.xlu0 %v648
      %v650 = vpop.xlane.xlu0 %649
      %v651 = vsel %vm612, %v639, 0.0
      %652 = vadd.xlane.f32.xlu0 %v651
      %v653 = vpop.xlane.xlu0 %652
      %v654 = vsel %vm612, %v640, 0.0
      %655 = vadd.xlane.f32.xlu0 %v654
      %v656 = vpop.xlane.xlu0 %655
      %v657 = vsel %vm612, %v641, 0.0
      %658 = vadd.xlane.f32.xlu0 %v657
      %v659 = vpop.xlane.xlu0 %658
      %v660 = vsel %vm612, %v642, 0.0
      %661 = vadd.xlane.f32.xlu0 %v660
      %v662 = vpop.xlane.xlu0 %661
      %v663 = vsel %vm612, %v643, 0.0
      %664 = vadd.xlane.f32.xlu0 %v663
      %v665 = vpop.xlane.xlu0 %664
      %v666 = vsel %vm612, %v644, 0.0
      %667 = vadd.xlane.f32.xlu0 %v666
      %v668 = vpop.xlane.xlu0 %667
      %v669 = vmul.f32 %v615, 0.0625
      %v670 = vmul.f32 %v618, 0.0625
      %v671 = vmul.f32 %v621, 0.0625
      %v672 = vmul.f32 %v624, 0.0625
      %v673 = vmul.f32 %v627, 0.0625
      %v674 = vmul.f32 %v630, 0.0625
      %v675 = vmul.f32 %v633, 0.0625
      %v676 = vmul.f32 %v636, 0.0625
      %v677 = vmul.f32 %v647, 0.0625
      %v678 = vmul.f32 %v650, 0.0625
      %v679 = vmul.f32 %v653, 0.0625
      %v680 = vmul.f32 %v656, 0.0625
      %v681 = vmul.f32 %v659, 0.0625
      %v682 = vmul.f32 %v662, 0.0625
      %v683 = vmul.f32 %v665, 0.0625
      %v684 = vmul.f32 %v668, 0.0625
      %v685 = vmul.f32 %v669, %v669
      %v686 = vmul.f32 %v670, %v670
      %v687 = vmul.f32 %v671, %v671
      %v688 = vmul.f32 %v672, %v672
      %v689 = vmul.f32 %v673, %v673
      %v690 = vmul.f32 %v674, %v674
      %v691 = vmul.f32 %v675, %v675
      %v692 = vmul.f32 %v676, %v676
      %v693 = vsub.f32 %v677, %v685
      %v694 = vsub.f32 %v678, %v686
      %v695 = vsub.f32 %v679, %v687
      %v696 = vsub.f32 %v680, %v688
      %v697 = vsub.f32 %v681, %v689
      %v698 = vsub.f32 %v682, %v690
      %v699 = vsub.f32 %v683, %v691
      %v700 = vsub.f32 %v684, %v692
      %v701 = vadd.f32 %v693, 1e-05
      %v702 = vadd.f32 %v694, 1e-05
      %v703 = vadd.f32 %v695, 1e-05
      %v704 = vadd.f32 %v696, 1e-05
      %v705 = vadd.f32 %v697, 1e-05
      %v706 = vadd.f32 %v698, 1e-05
      %v707 = vadd.f32 %v699, 1e-05
      %v708 = vadd.f32 %v700, 1e-05
      %v709 = vrsqrt.pop %v701
      %v710 = vmul.f32 %v709, %v701
      %v711 = vmul.f32 %v710, %v709
      %v712 = vmul.f32 0.5, %v711
      %v713 = vsub.f32 1.5, %v712
      %v714 = vmul.f32 %v709, %v713
      %vm715 = vweird.f32 %v701
      %vm716 = vweird.f32 %v709
      %vm717 = vmor %vm715, %vm716
      %v718 = vsel %vm717, %v709, %v714
      %v719 = vrsqrt.pop %v702
      %v720 = vmul.f32 %v719, %v702
      %v721 = vmul.f32 %v720, %v719
      %v722 = vmul.f32 0.5, %v721
      %v723 = vsub.f32 1.5, %v722
      %v724 = vmul.f32 %v719, %v723
      %vm725 = vweird.f32 %v702
      %vm726 = vweird.f32 %v719
      %vm727 = vmor %vm725, %vm726
      %v728 = vsel %vm727, %v719, %v724
      %v729 = vrsqrt.pop %v703
      %v730 = vmul.f32 %v729, %v703
      %v731 = vmul.f32 %v730, %v729
      %v732 = vmul.f32 0.5, %v731
      %v733 = vsub.f32 1.5, %v732
      %v734 = vmul.f32 %v729, %v733
      %vm735 = vweird.f32 %v703
      %vm736 = vweird.f32 %v729
      %vm737 = vmor %vm735, %vm736
      %v738 = vsel %vm737, %v729, %v734
      %v739 = vrsqrt.pop %v704
      %v740 = vmul.f32 %v739, %v704
      %v741 = vmul.f32 %v740, %v739
      %v742 = vmul.f32 0.5, %v741
      %v743 = vsub.f32 1.5, %v742
      %v744 = vmul.f32 %v739, %v743
      %vm745 = vweird.f32 %v704
      %vm746 = vweird.f32 %v739
      %vm747 = vmor %vm745, %vm746
      %v748 = vsel %vm747, %v739, %v744
      %v749 = vrsqrt.pop %v705
      %v750 = vmul.f32 %v749, %v705
      %v751 = vmul.f32 %v750, %v749
      %v752 = vmul.f32 0.5, %v751
      %v753 = vsub.f32 1.5, %v752
      %v754 = vmul.f32 %v749, %v753
      %vm755 = vweird.f32 %v705
      %vm756 = vweird.f32 %v749
      %vm757 = vmor %vm755, %vm756
      %v758 = vsel %vm757, %v749, %v754
      %v759 = vrsqrt.pop %v706
      %v760 = vmul.f32 %v759, %v706
      %v761 = vmul.f32 %v760, %v759
      %v762 = vmul.f32 0.5, %v761
      %v763 = vsub.f32 1.5, %v762
      %v764 = vmul.f32 %v759, %v763
      %vm765 = vweird.f32 %v706
      %vm766 = vweird.f32 %v759
      %vm767 = vmor %vm765, %vm766
      %v768 = vsel %vm767, %v759, %v764
      %v769 = vrsqrt.pop %v707
      %v770 = vmul.f32 %v769, %v707
      %v771 = vmul.f32 %v770, %v769
      %v772 = vmul.f32 0.5, %v771
      %v773 = vsub.f32 1.5, %v772
      %v774 = vmul.f32 %v769, %v773
      %vm775 = vweird.f32 %v707
      %vm776 = vweird.f32 %v769
      %vm777 = vmor %vm775, %vm776
      %v778 = vsel %vm777, %v769, %v774
      %v779 = vrsqrt.pop %v708
      %v780 = vmul.f32 %v779, %v708
      %v781 = vmul.f32 %v780, %v779
      %v782 = vmul.f32 0.5, %v781
      %v783 = vsub.f32 1.5, %v782
      %v784 = vmul.f32 %v779, %v783
      %vm785 = vweird.f32 %v708
      %vm786 = vweird.f32 %v779
      %vm787 = vmor %vm785, %vm786
      %v788 = vsel %vm787, %v779, %v784
      %v789 = vsub.f32 %v593, %v669
      %v790 = vsub.f32 %v595, %v670
      %v791 = vsub.f32 %v598, %v671
      %v792 = vsub.f32 %v600, %v672
      %v793 = vsub.f32 %v603, %v673
      %v794 = vsub.f32 %v605, %v674
      %v795 = vsub.f32 %v608, %v675
      %v796 = vsub.f32 %v610, %v676
      %v797 = vmul.f32 %v789, %v718
      %v798 = vmul.f32 %v790, %v728
      %v799 = vmul.f32 %v791, %v738
      %v800 = vmul.f32 %v792, %v748
      %v801 = vmul.f32 %v793, %v758
      %v802 = vmul.f32 %v794, %v768
      %v803 = vmul.f32 %v795, %v778
      %v804 = vmul.f32 %v796, %v788
      %v805 = vmax.f32 %v797, 0.0
      %v806 = vmax.f32 %v798, 0.0
      %v807 = vmax.f32 %v799, 0.0
      %v808 = vmax.f32 %v800, 0.0
      %v809 = vmax.f32 %v801, 0.0
      %v810 = vmax.f32 %v802, 0.0
      %v811 = vmax.f32 %v803, 0.0
      %v812 = vmax.f32 %v804, 0.0
      %813 = vst.msk [vmem:[%s143] sm:$0xff] %vm612, %v805
      %814 = vst.msk [vmem:[%s143 + $0x8] sm:$0xff] %vm612, %v806
      %815 = vst.msk [vmem:[%s143 + $0x10] sm:$0xff] %vm612, %v807
      %816 = vst.msk [vmem:[%s143 + $0x18] sm:$0xff] %vm612, %v808
      %817 = vst.msk [vmem:[%s143 + $0x20] sm:$0xff] %vm612, %v809
      %818 = vst.msk [vmem:[%s143 + $0x28] sm:$0xff] %vm612, %v810
      %819 = vst.msk [vmem:[%s143 + $0x30] sm:$0xff] %vm612, %v811
      %820 = vst.msk [vmem:[%s143 + $0x38] sm:$0xff] %vm612, %v812
      %p821 = scmp.lt.s32.totalorder %s13, 1
      %s822 = scalar_select %p821, %s13, 1
      %s823 = smul.addr %s822, 8
      %s824 = smul.addr %s823, 8
      %s825 = scalar_lea.vmem %s2, %s824
      // Predicated region
      $region29: #{discriminator_forward.7} parent=27 // pred_check
        %p826 = pneg %p78
      $region30: #{discriminator_forward.7} parent=27 // pred_check_branch
        %828 = sbr.rel (%p826) target = $region32
      $region31: #{discriminator_forward.7} parent=27 // pred_region
        _
      $region32: #{discriminator_forward.7} parent=27 // pred_fallthru
        _
    $region28: #{discriminator_forward.7} parent=5 // pred_fallthru
      _
    %p829 = scmp.le.s32.totalorder 2, %s8
    // Predicated region
    $region33: #{discriminator_forward.7} parent=5 // pred_check
      %p830 = pneg %p829
    $region34: #{discriminator_forward.7} parent=5 // pred_check_branch
      %832 = sbr.rel (%p830) target = $region36
    $region35: #{discriminator_forward.7} parent=5 // pred_region
      %s833 = ssub.s32 %s8, 2
      // Predicated region
      $region37: #{discriminator_forward.7} parent=35 // pred_check
        %p834 = pneg %p84
      $region38: #{discriminator_forward.7} parent=35 // pred_check_branch
        %836 = sbr.rel (%p834) target = $region40
      $region39: #{discriminator_forward.7} parent=35 // pred_region
        %p837 = scmp.lt.s32.totalorder %s14, 1
        %s838 = scalar_select %p837, %s14, 1
        %s839 = smul.addr %s838, 8
        %s840 = smul.addr %s839, 8
        %s841 = scalar_lea.vmem %s2, %s840
      $region40: #{discriminator_forward.7} parent=35 // pred_fallthru
        _
    $region36: #{discriminator_forward.7} parent=5 // pred_fallthru
      _
  $region6: #{discriminator_forward.7} parent=0 // loop_footer
    %s12 = sadd.s32 1, %s8
  $region7: #{discriminator_forward.7} parent=0 // loop_footer_branch
    %7 = sbr.rel target = $region3
  $region8: #{discriminator_forward.7} parent=0 // loop_exit
    _

</llo_original>
